<compile_context>
chip_gen: v7x
topology: tpu7x:2x2x1
jax: 0.10.0
libtpu: 0.0.40
codegen_flags: <defaults>
</compile_context>

<pallas_src>
import jax
import jax.numpy as jnp
from jax.experimental import pallas as pl
from jax.experimental.pallas import tpu as pltpu

INPUT_SIZE = 4      # cartpole observation
HIDDEN1 = 32
HIDDEN2 = 64
OUTPUT_SIZE = 2     # cartpole actions

# Lane-aligned (zero-padded) hidden dims; padded lanes stay exactly 0 through the
# ReLUs and contribute nothing to the final 2 action columns.
H1_PAD = 128
H2_PAD = 128

MAX_TILE_B = 1024   # cap on the batch tile (VMEM is never close to binding here)


def dqn_linear_kernel(x_ref, w1_ref, b1_ref, w2_ref, b2_ref, w3_ref, b3_ref, o_ref):
    # One batch tile per grid step; weights/biases are VMEM-resident across steps.
    x = x_ref[...]                                                       # (tile_b, 4)
    h1 = jnp.dot(x, w1_ref[...], preferred_element_type=jnp.float32) + b1_ref[...]
    h1 = jnp.maximum(h1, 0.0)                                            # F.relu
    h2 = jnp.dot(h1, w2_ref[...], preferred_element_type=jnp.float32) + b2_ref[...]
    h2 = jnp.maximum(h2, 0.0)                                            # F.relu
    out = jnp.dot(h2, w3_ref[...], preferred_element_type=jnp.float32) + b3_ref[...]
    o_ref[...] = out.astype(o_ref.dtype)                                 # (tile_b, 2)


def init_params(key):
    # Deterministic init mimicking nn.Linear default (uniform(-1/sqrt(in), 1/sqrt(in))).
    # Weights are stored [in, out] so the kernel computes x @ W + b directly.
    def linear(key, fan_in, fan_out):
        kw, kb = jax.random.split(key)
        bound = 1.0 / jnp.sqrt(fan_in)
        w = jax.random.uniform(kw, (fan_in, fan_out), jnp.float32, -bound, bound)
        b = jax.random.uniform(kb, (1, fan_out), jnp.float32, -bound, bound)
        return w, b

    k1, k2, k3 = jax.random.split(key, 3)
    w1, b1 = linear(k1, INPUT_SIZE, HIDDEN1)
    w2, b2 = linear(k2, HIDDEN1, HIDDEN2)
    w3, b3 = linear(k3, HIDDEN2, OUTPUT_SIZE)
    return (w1, b1, w2, b2, w3, b3)


def pad_params(params):
    """Zero-pad hidden dims to lane-aligned shapes (done once, off the hot path).

    Only the hidden (lane) dims are padded: w1 keeps its 4 input rows and
    w3/b3 keep their 2 output columns, so the kernel's input and output stay
    at their true widths.
    """
    w1, b1, w2, b2, w3, b3 = params

    def pad2(a, rows, cols):
        return jnp.pad(a, ((0, rows - a.shape[0]), (0, cols - a.shape[1])))

    return (pad2(w1, INPUT_SIZE, H1_PAD), pad2(b1, 1, H1_PAD),
            pad2(w2, H1_PAD, H2_PAD), pad2(b2, 1, H2_PAD),
            pad2(w3, H2_PAD, OUTPUT_SIZE), pad2(b3, 1, OUTPUT_SIZE))


def _pick_tile_b(batch):
    """Fewest grid steps possible, but keep >= 2 steps so v7x's two TCs both get work."""
    if batch <= 8:
        return 8
    half = -(-batch // 2)            # cdiv(batch, 2): target exactly two tiles
    tile = -(-half // 8) * 8         # round up to the sublane grain
    return min(tile, MAX_TILE_B)


@jax.jit
def dqn_linear_forward(x, padded_params):
    w1, b1, w2, b2, w3, b3 = padded_params
    B = x.shape[0]
    x = x.astype(jnp.float32)

    tile_b = _pick_tile_b(B)
    n_tiles = pl.cdiv(B, tile_b)
    b_pad = n_tiles * tile_b

    # Hot path (tile-aligned batch, e.g. power-of-two replay batches): no pad op.
    if b_pad != B:
        x = jnp.pad(x, ((0, b_pad - B), (0, 0)))

    resident = lambda shape: pl.BlockSpec(shape, lambda i: (0, 0))   # weights: DMA once

    flops = 2 * b_pad * (INPUT_SIZE * H1_PAD + H1_PAD * H2_PAD + H2_PAD * OUTPUT_SIZE)
    bytes_accessed = 4 * (b_pad * INPUT_SIZE + b_pad * OUTPUT_SIZE
                          + INPUT_SIZE * H1_PAD + H1_PAD
                          + H1_PAD * H2_PAD + H2_PAD
                          + H2_PAD * OUTPUT_SIZE + OUTPUT_SIZE)

    out = pl.pallas_call(
        dqn_linear_kernel,
        out_shape=jax.ShapeDtypeStruct((b_pad, OUTPUT_SIZE), jnp.float32),
        grid=(n_tiles,),
        in_specs=[
            pl.BlockSpec((tile_b, INPUT_SIZE), lambda i: (i, 0)),    # x: tiled over batch
            resident((INPUT_SIZE, H1_PAD)), resident((1, H1_PAD)),
            resident((H1_PAD, H2_PAD)), resident((1, H2_PAD)),
            resident((H2_PAD, OUTPUT_SIZE)), resident((1, OUTPUT_SIZE)),
        ],
        out_specs=pl.BlockSpec((tile_b, OUTPUT_SIZE), lambda i: (i, 0)),  # true 2 cols only
        compiler_params=pltpu.CompilerParams(
            dimension_semantics=("parallel",)),                      # v7x: 2 TCs over batch
        cost_estimate=pl.CostEstimate(
            flops=flops, transcendentals=0, bytes_accessed=bytes_accessed),
    )(x, w1, b1, w2, b2, w3, b3)

    if b_pad != B:
        out = out[:B]            # only on the non-aligned path
    return out


def reference_forward(x, params):
    w1, b1, w2, b2, w3, b3 = params
    h1 = jnp.maximum(x @ w1 + b1, 0.0)
    h2 = jnp.maximum(h1 @ w2 + b2, 0.0)
    return h2 @ w3 + b3


if __name__ == "__main__":
    key = jax.random.PRNGKey(0)
    kx, kx2, kp = jax.random.split(key, 3)

    params = init_params(kp)
    padded_params = pad_params(params)

    # Case 1: typical DQN replay batch (tile-aligned hot path: no pad, no slice, 2 tiles).
    BATCH = 1024
    x = jax.random.normal(kx, (BATCH, INPUT_SIZE), jnp.float32)
    out = jax.block_until_ready(dqn_linear_forward(x, padded_params))
    ref = reference_forward(x, params)
    assert out.shape == (BATCH, OUTPUT_SIZE)
    assert jnp.allclose(out, ref, atol=2e-4, rtol=2e-4), float(jnp.max(jnp.abs(out - ref)))

    # Case 2: small, non-aligned batch (exercises the padded/sliced fallback path).
    BATCH2 = 7
    x2 = jax.random.normal(kx2, (BATCH2, INPUT_SIZE), jnp.float32)
    out2 = jax.block_until_ready(dqn_linear_forward(x2, padded_params))
    ref2 = reference_forward(x2, params)
    assert out2.shape == (BATCH2, OUTPUT_SIZE)
    assert jnp.allclose(out2, ref2, atol=2e-4, rtol=2e-4), float(jnp.max(jnp.abs(out2 - ref2)))

    print("KERNEL_OK")
</pallas_src>

<mosaic_0001>
module attributes {stable_mosaic.version = 11 : i64} {
  func.func @dqn_linear_kernel(%arg0: i32, %arg1: memref<512x4xf32, #tpu.memory_space<vmem>>, %arg2: memref<4x128xf32, #tpu.memory_space<vmem>>, %arg3: memref<1x128xf32, #tpu.memory_space<vmem>>, %arg4: memref<128x128xf32, #tpu.memory_space<vmem>>, %arg5: memref<1x128xf32, #tpu.memory_space<vmem>>, %arg6: memref<128x2xf32, #tpu.memory_space<vmem>>, %arg7: memref<1x2xf32, #tpu.memory_space<vmem>>, %arg8: memref<512x2xf32, #tpu.memory_space<vmem>>) attributes {dimension_semantics = [#tpu.dimension_semantics<parallel>], iteration_bounds = array<i64: 2>, scalar_prefetch = 0 : i64, scratch_operands = 0 : i64, tpu.core_type = #tpu.core_type<tc>, window_params = [{transform_indices = @transform_0, window_bounds = array<i64: 512, 4>}, {pipeline_mode = #tpu.pipeline_mode<synchronous>, transform_indices = @transform_1, window_bounds = array<i64: 4, 128>}, {pipeline_mode = #tpu.pipeline_mode<synchronous>, transform_indices = @transform_2, window_bounds = array<i64: 1, 128>}, {pipeline_mode = #tpu.pipeline_mode<synchronous>, transform_indices = @transform_3, window_bounds = array<i64: 128, 128>}, {pipeline_mode = #tpu.pipeline_mode<synchronous>, transform_indices = @transform_4, window_bounds = array<i64: 1, 128>}, {pipeline_mode = #tpu.pipeline_mode<synchronous>, transform_indices = @transform_5, window_bounds = array<i64: 128, 2>}, {pipeline_mode = #tpu.pipeline_mode<synchronous>, transform_indices = @transform_6, window_bounds = array<i64: 1, 2>}, {transform_indices = @transform_7, window_bounds = array<i64: 512, 2>}]} {
    %c0 = arith.constant 0 : index
    %c0_0 = arith.constant 0 : index
    %0 = vector.load %arg1[%c0, %c0_0] : memref<512x4xf32, #tpu.memory_space<vmem>>, vector<512x4xf32>
    %c0_1 = arith.constant 0 : index
    %c0_2 = arith.constant 0 : index
    %1 = vector.load %arg2[%c0_1, %c0_2] : memref<4x128xf32, #tpu.memory_space<vmem>>, vector<4x128xf32>
    %cst = arith.constant dense<0.000000e+00> : vector<512x128xf32>
    %2 = tpu.matmul %0, %1, %cst {dimension_numbers = #tpu.dot_dimension_numbers<[1], [0], [0], [1], [0, 0, 1, 1], [], []>} : vector<512x4xf32>, vector<4x128xf32>, vector<512x128xf32> -> vector<512x128xf32>
    %c0_3 = arith.constant 0 : index
    %c0_4 = arith.constant 0 : index
    %3 = vector.load %arg3[%c0_3, %c0_4] : memref<1x128xf32, #tpu.memory_space<vmem>>, vector<1x128xf32>
    %4 = vector.broadcast %3 : vector<1x128xf32> to vector<512x128xf32>
    %5 = arith.addf %2, %4 : vector<512x128xf32>
    %cst_5 = arith.constant 0.000000e+00 : f32
    %6 = vector.broadcast %cst_5 : f32 to vector<512x128xf32>
    %7 = arith.maximumf %5, %6 : vector<512x128xf32>
    %c0_6 = arith.constant 0 : index
    %c0_7 = arith.constant 0 : index
    %8 = vector.load %arg4[%c0_6, %c0_7] : memref<128x128xf32, #tpu.memory_space<vmem>>, vector<128x128xf32>
    %cst_8 = arith.constant dense<0.000000e+00> : vector<512x128xf32>
    %9 = tpu.matmul %7, %8, %cst_8 {dimension_numbers = #tpu.dot_dimension_numbers<[1], [0], [0], [1], [0, 0, 1, 1], [], []>} : vector<512x128xf32>, vector<128x128xf32>, vector<512x128xf32> -> vector<512x128xf32>
    %c0_9 = arith.constant 0 : index
    %c0_10 = arith.constant 0 : index
    %10 = vector.load %arg5[%c0_9, %c0_10] : memref<1x128xf32, #tpu.memory_space<vmem>>, vector<1x128xf32>
    %11 = vector.broadcast %10 : vector<1x128xf32> to vector<512x128xf32>
    %12 = arith.addf %9, %11 : vector<512x128xf32>
    %cst_11 = arith.constant 0.000000e+00 : f32
    %13 = vector.broadcast %cst_11 : f32 to vector<512x128xf32>
    %14 = arith.maximumf %12, %13 : vector<512x128xf32>
    %c0_12 = arith.constant 0 : index
    %c0_13 = arith.constant 0 : index
    %15 = vector.load %arg6[%c0_12, %c0_13] : memref<128x2xf32, #tpu.memory_space<vmem>>, vector<128x2xf32>
    %cst_14 = arith.constant dense<0.000000e+00> : vector<512x2xf32>
    %16 = tpu.matmul %14, %15, %cst_14 {dimension_numbers = #tpu.dot_dimension_numbers<[1], [0], [0], [1], [0, 0, 1, 1], [], []>} : vector<512x128xf32>, vector<128x2xf32>, vector<512x2xf32> -> vector<512x2xf32>
    %c0_15 = arith.constant 0 : index
    %c0_16 = arith.constant 0 : index
    %17 = vector.load %arg7[%c0_15, %c0_16] : memref<1x2xf32, #tpu.memory_space<vmem>>, vector<1x2xf32>
    %18 = vector.broadcast %17 : vector<1x2xf32> to vector<512x2xf32>
    %19 = arith.addf %16, %18 : vector<512x2xf32>
    %c0_17 = arith.constant 0 : index
    %c0_18 = arith.constant 0 : index
    %20 = vector.load %arg8[%c0_17, %c0_18] : memref<512x2xf32, #tpu.memory_space<vmem>>, vector<512x2xf32>
    tpu.vector_store %arg8[%c0_17, %c0_18], %19 {strides = array<i32>} : memref<512x2xf32, #tpu.memory_space<vmem>>, vector<512x2xf32>,
    return
  }
  func.func @transform_0(%arg0: i32) -> (i32, i32) {
    %c0_i32 = arith.constant 0 : i32
    %c0_i32_0 = arith.constant 0 : i32
    return %arg0, %c0_i32 : i32, i32
  }
  func.func @transform_1(%arg0: i32) -> (i32, i32) {
    %c0_i32 = arith.constant 0 : i32
    %c0_i32_0 = arith.constant 0 : i32
    %c0_i32_1 = arith.constant 0 : i32
    return %c0_i32, %c0_i32_0 : i32, i32
  }
  func.func @transform_2(%arg0: i32) -> (i32, i32) {
    %c0_i32 = arith.constant 0 : i32
    %c0_i32_0 = arith.constant 0 : i32
    %c0_i32_1 = arith.constant 0 : i32
    return %c0_i32, %c0_i32_0 : i32, i32
  }
  func.func @transform_3(%arg0: i32) -> (i32, i32) {
    %c0_i32 = arith.constant 0 : i32
    %c0_i32_0 = arith.constant 0 : i32
    %c0_i32_1 = arith.constant 0 : i32
    return %c0_i32, %c0_i32_0 : i32, i32
  }
  func.func @transform_4(%arg0: i32) -> (i32, i32) {
    %c0_i32 = arith.constant 0 : i32
    %c0_i32_0 = arith.constant 0 : i32
    %c0_i32_1 = arith.constant 0 : i32
    return %c0_i32, %c0_i32_0 : i32, i32
  }
  func.func @transform_5(%arg0: i32) -> (i32, i32) {
    %c0_i32 = arith.constant 0 : i32
    %c0_i32_0 = arith.constant 0 : i32
    %c0_i32_1 = arith.constant 0 : i32
    return %c0_i32, %c0_i32_0 : i32, i32
  }
  func.func @transform_6(%arg0: i32) -> (i32, i32) {
    %c0_i32 = arith.constant 0 : i32
    %c0_i32_0 = arith.constant 0 : i32
    %c0_i32_1 = arith.constant 0 : i32
    return %c0_i32, %c0_i32_0 : i32, i32
  }
  func.func @transform_7(%arg0: i32) -> (i32, i32) {
    %c0_i32 = arith.constant 0 : i32
    %c0_i32_0 = arith.constant 0 : i32
    return %arg0, %c0_i32 : i32, i32
  }
}

</mosaic_0001>

<llo_original>
// kernel: dqn_linear_forward.1
$region0: #{dqn_linear_forward.1}
  #allocation0 [shape = 'u32[]', space=smem, size = 0x4, offset = 0x4, fixed_abs, tag = 'smem constant byte address 0x4 - core index']
  #allocation1 [shape = 'u32[144,128]{1,0:T(1,128)}', space=vmem, size = 0x12000, scoped, tag = 'internal scratch']
  %s0 = inlined_call_operand.vmem [shape: f32[1024,4], index: 0, kind: input, shape index: {}]
  %s1 = inlined_call_operand.vmem [shape: f32[4,128], index: 1, kind: input, shape index: {}]
  %s2 = inlined_call_operand.vmem [shape: f32[1,128], index: 2, kind: input, shape index: {}]
  %s3 = inlined_call_operand.vmem [shape: f32[128,128], index: 3, kind: input, shape index: {}]
  %s4 = inlined_call_operand.vmem [shape: f32[1,128], index: 4, kind: input, shape index: {}]
  %s5 = inlined_call_operand.vmem [shape: f32[128,2], index: 5, kind: input, shape index: {}]
  %s6 = inlined_call_operand.vmem [shape: f32[1,2], index: 6, kind: input, shape index: {}]
  %s7 = inlined_call_operand.vmem [shape: f32[1024,2], index: 7, kind: output, shape index: {}]
  %s8 = sld [smem:[#allocation0]]
  $region61: #{dqn_linear_forward.1} parent=0
    _
  %s10 = ssub.s32 1, %s8
  %s11 = scalar_select 0, %s10, %s8
  loop: start=0, step=1, limit=4
  $region2: #{dqn_linear_forward.1} parent=0 // loop_pre_header
    _
  $region3: #{dqn_linear_forward.1} parent=0 // loop_header
    %s13 = sphi 0, %s17
    %p14 = scmp.ge.s32.totalorder %s13, 4
    %s23 = sphi 0, %s25
    %s26 = sphi 0, %s23
    %s27 = sphi 0, %s26
    %s43 = sphi 0, %s27
    %s47 = sphi 0, %s47
    %s49 = sphi 0, %s47
    %s50 = sphi 0, %s49
    %s64 = sphi 0, %s50
    %s68 = sphi 0, %s68
    %s70 = sphi 0, %s68
    %s71 = sphi 0, %s70
    %s85 = sphi 0, %s71
    %s89 = sphi 0, %s89
    %s91 = sphi 0, %s89
    %s92 = sphi 0, %s91
    %s106 = sphi 0, %s92
    %s110 = sphi 0, %s110
    %s112 = sphi 0, %s110
    %s113 = sphi 0, %s112
    %s127 = sphi 0, %s113
    %s131 = sphi 0, %s131
    %s133 = sphi 0, %s131
    %s134 = sphi 0, %s133
    %s148 = sphi 0, %s134
    %s152 = sphi 0, %s152
    %s154 = sphi 0, %s152
    %s155 = sphi 0, %s154
    %s169 = sphi 0, %s155
    %s175 = sphi 0, %s177
    %s178 = sphi 0, %s175
    %s179 = sphi 0, %s178
    %s195 = sphi 0, %s179
  $region4: #{dqn_linear_forward.1} parent=0 // loop_header_branch
    %16 = sbr.rel (%p14) target = $region8
  $region5: #{dqn_linear_forward.1} parent=0 // loop_body
    %s18 = ssub.s32 %s13, 1
    %s19 = ssub.s32 %s13, 2
    %s20 = sadd.s32 %s13, 1
    %s21 = ssub.s32 %s13, %s20
    %p22 = scmp.eq.s32.totalorder %s21, 0
    %s24 = sadd.s32 %s23, 1
    %s25 = scalar_select %p22, %s23, %s24
    %p28 = pneg %p22
    %p29 = scmp.eq.s32.totalorder %s13, 1
    %p30 = por %p28, %p29
    %p31 = scmp.ne.s32.totalorder %s23, %s26
    %p32 = scmp.eq.s32.totalorder %s13, 0
    %p33 = por %p31, %p32
    %p34 = scmp.ne.s32.totalorder %s23, %s26
    %p35 = scmp.eq.s32.totalorder %s18, 1
    %p36 = por %p34, %p35
    %p37 = scmp.ne.s32.totalorder %s26, %s27
    %p38 = scmp.eq.s32.totalorder %s18, 0
    %p39 = por %p37, %p38
    %p40 = scmp.ne.s32.totalorder %s26, %s27
    %p41 = scmp.eq.s32.totalorder %s19, 1
    %p42 = por %p40, %p41
    %p44 = scmp.ne.s32.totalorder %s27, %s43
    %p45 = scmp.eq.s32.totalorder %s19, 0
    %p46 = por %p44, %p45
    %s48 = sadd.s32 %s47, 1
    %p51 = scmp.eq.s32.totalorder %s13, 1
    %p52 = scmp.ne.s32.totalorder %s47, %s49
    %p53 = scmp.eq.s32.totalorder %s13, 0
    %p54 = por %p52, %p53
    %p55 = scmp.ne.s32.totalorder %s47, %s49
    %p56 = scmp.eq.s32.totalorder %s18, 1
    %p57 = por %p55, %p56
    %p58 = scmp.ne.s32.totalorder %s49, %s50
    %p59 = scmp.eq.s32.totalorder %s18, 0
    %p60 = por %p58, %p59
    %p61 = scmp.ne.s32.totalorder %s49, %s50
    %p62 = scmp.eq.s32.totalorder %s19, 1
    %p63 = por %p61, %p62
    %p65 = scmp.ne.s32.totalorder %s50, %s64
    %p66 = scmp.eq.s32.totalorder %s19, 0
    %p67 = por %p65, %p66
    %s69 = sadd.s32 %s68, 1
    %p72 = scmp.eq.s32.totalorder %s13, 1
    %p73 = scmp.ne.s32.totalorder %s68, %s70
    %p74 = scmp.eq.s32.totalorder %s13, 0
    %p75 = por %p73, %p74
    %p76 = scmp.ne.s32.totalorder %s68, %s70
    %p77 = scmp.eq.s32.totalorder %s18, 1
    %p78 = por %p76, %p77
    %p79 = scmp.ne.s32.totalorder %s70, %s71
    %p80 = scmp.eq.s32.totalorder %s18, 0
    %p81 = por %p79, %p80
    %p82 = scmp.ne.s32.totalorder %s70, %s71
    %p83 = scmp.eq.s32.totalorder %s19, 1
    %p84 = por %p82, %p83
    %p86 = scmp.ne.s32.totalorder %s71, %s85
    %p87 = scmp.eq.s32.totalorder %s19, 0
    %p88 = por %p86, %p87
    %s90 = sadd.s32 %s89, 1
    %p93 = scmp.eq.s32.totalorder %s13, 1
    %p94 = scmp.ne.s32.totalorder %s89, %s91
    %p95 = scmp.eq.s32.totalorder %s13, 0
    %p96 = por %p94, %p95
    %p97 = scmp.ne.s32.totalorder %s89, %s91
    %p98 = scmp.eq.s32.totalorder %s18, 1
    %p99 = por %p97, %p98
    %p100 = scmp.ne.s32.totalorder %s91, %s92
    %p101 = scmp.eq.s32.totalorder %s18, 0
    %p102 = por %p100, %p101
    %p103 = scmp.ne.s32.totalorder %s91, %s92
    %p104 = scmp.eq.s32.totalorder %s19, 1
    %p105 = por %p103, %p104
    %p107 = scmp.ne.s32.totalorder %s92, %s106
    %p108 = scmp.eq.s32.totalorder %s19, 0
    %p109 = por %p107, %p108
    %s111 = sadd.s32 %s110, 1
    %p114 = scmp.eq.s32.totalorder %s13, 1
    %p115 = scmp.ne.s32.totalorder %s110, %s112
    %p116 = scmp.eq.s32.totalorder %s13, 0
    %p117 = por %p115, %p116
    %p118 = scmp.ne.s32.totalorder %s110, %s112
    %p119 = scmp.eq.s32.totalorder %s18, 1
    %p120 = por %p118, %p119
    %p121 = scmp.ne.s32.totalorder %s112, %s113
    %p122 = scmp.eq.s32.totalorder %s18, 0
    %p123 = por %p121, %p122
    %p124 = scmp.ne.s32.totalorder %s112, %s113
    %p125 = scmp.eq.s32.totalorder %s19, 1
    %p126 = por %p124, %p125
    %p128 = scmp.ne.s32.totalorder %s113, %s127
    %p129 = scmp.eq.s32.totalorder %s19, 0
    %p130 = por %p128, %p129
    %s132 = sadd.s32 %s131, 1
    %p135 = scmp.eq.s32.totalorder %s13, 1
    %p136 = scmp.ne.s32.totalorder %s131, %s133
    %p137 = scmp.eq.s32.totalorder %s13, 0
    %p138 = por %p136, %p137
    %p139 = scmp.ne.s32.totalorder %s131, %s133
    %p140 = scmp.eq.s32.totalorder %s18, 1
    %p141 = por %p139, %p140
    %p142 = scmp.ne.s32.totalorder %s133, %s134
    %p143 = scmp.eq.s32.totalorder %s18, 0
    %p144 = por %p142, %p143
    %p145 = scmp.ne.s32.totalorder %s133, %s134
    %p146 = scmp.eq.s32.totalorder %s19, 1
    %p147 = por %p145, %p146
    %p149 = scmp.ne.s32.totalorder %s134, %s148
    %p150 = scmp.eq.s32.totalorder %s19, 0
    %p151 = por %p149, %p150
    %s153 = sadd.s32 %s152, 1
    %p156 = scmp.eq.s32.totalorder %s13, 1
    %p157 = scmp.ne.s32.totalorder %s152, %s154
    %p158 = scmp.eq.s32.totalorder %s13, 0
    %p159 = por %p157, %p158
    %p160 = scmp.ne.s32.totalorder %s152, %s154
    %p161 = scmp.eq.s32.totalorder %s18, 1
    %p162 = por %p160, %p161
    %p163 = scmp.ne.s32.totalorder %s154, %s155
    %p164 = scmp.eq.s32.totalorder %s18, 0
    %p165 = por %p163, %p164
    %p166 = scmp.ne.s32.totalorder %s154, %s155
    %p167 = scmp.eq.s32.totalorder %s19, 1
    %p168 = por %p166, %p167
    %p170 = scmp.ne.s32.totalorder %s155, %s169
    %p171 = scmp.eq.s32.totalorder %s19, 0
    %p172 = por %p170, %p171
    %s173 = ssub.s32 %s13, %s20
    %p174 = scmp.eq.s32.totalorder %s173, 0
    %s176 = sadd.s32 %s175, 1
    %s177 = scalar_select %p174, %s175, %s176
    %p180 = pneg %p174
    %p181 = scmp.eq.s32.totalorder %s13, 1
    %p182 = por %p180, %p181
    %p183 = scmp.ne.s32.totalorder %s175, %s178
    %p184 = scmp.eq.s32.totalorder %s13, 0
    %p185 = por %p183, %p184
    %p186 = scmp.ne.s32.totalorder %s175, %s178
    %p187 = scmp.eq.s32.totalorder %s18, 1
    %p188 = por %p186, %p187
    %p189 = scmp.ne.s32.totalorder %s178, %s179
    %p190 = scmp.eq.s32.totalorder %s18, 0
    %p191 = por %p189, %p190
    %p192 = scmp.ne.s32.totalorder %s178, %s179
    %p193 = scmp.eq.s32.totalorder %s19, 1
    %p194 = por %p192, %p193
    %p196 = scmp.ne.s32.totalorder %s179, %s195
    %p197 = scmp.eq.s32.totalorder %s19, 0
    %p198 = por %p196, %p197
    %p199 = scmp.le.s32.totalorder 1, %s13
    %p200 = scmp.lt.s32.totalorder %s13, 3
    %p201 = pnand %p199, %p200
    %p202 = pneg %p201
    // Predicated region
    $region9: #{dqn_linear_forward.1} parent=5 // pred_check
      _
    $region10: #{dqn_linear_forward.1} parent=5 // pred_check_branch
      %204 = sbr.rel (%p201) target = $region12
    $region11: #{dqn_linear_forward.1} parent=5 // pred_region
      %s205 = ssub.s32 %s13, 1
      // Predicated region
      $region13: #{dqn_linear_forward.1} parent=11 // pred_check
        %p206 = pneg %p60
      $region14: #{dqn_linear_forward.1} parent=11 // pred_check_branch
        %208 = sbr.rel (%p206) target = $region16
      $region15: #{dqn_linear_forward.1} parent=11 // pred_region
        _
      $region16: #{dqn_linear_forward.1} parent=11 // pred_fallthru
        _
      // Predicated region
      $region17: #{dqn_linear_forward.1} parent=11 // pred_check
        %p209 = pneg %p81
      $region18: #{dqn_linear_forward.1} parent=11 // pred_check_branch
        %211 = sbr.rel (%p209) target = $region20
      $region19: #{dqn_linear_forward.1} parent=11 // pred_region
        _
      $region20: #{dqn_linear_forward.1} parent=11 // pred_fallthru
        _
      // Predicated region
      $region21: #{dqn_linear_forward.1} parent=11 // pred_check
        %p212 = pneg %p102
      $region22: #{dqn_linear_forward.1} parent=11 // pred_check_branch
        %214 = sbr.rel (%p212) target = $region24
      $region23: #{dqn_linear_forward.1} parent=11 // pred_region
        _
      $region24: #{dqn_linear_forward.1} parent=11 // pred_fallthru
        _
      // Predicated region
      $region25: #{dqn_linear_forward.1} parent=11 // pred_check
        %p215 = pneg %p123
      $region26: #{dqn_linear_forward.1} parent=11 // pred_check_branch
        %217 = sbr.rel (%p215) target = $region28
      $region27: #{dqn_linear_forward.1} parent=11 // pred_region
        _
      $region28: #{dqn_linear_forward.1} parent=11 // pred_fallthru
        _
      // Predicated region
      $region29: #{dqn_linear_forward.1} parent=11 // pred_check
        %p218 = pneg %p144
      $region30: #{dqn_linear_forward.1} parent=11 // pred_check_branch
        %220 = sbr.rel (%p218) target = $region32
      $region31: #{dqn_linear_forward.1} parent=11 // pred_region
        _
      $region32: #{dqn_linear_forward.1} parent=11 // pred_fallthru
        _
      // Predicated region
      $region33: #{dqn_linear_forward.1} parent=11 // pred_check
        %p221 = pneg %p165
      $region34: #{dqn_linear_forward.1} parent=11 // pred_check_branch
        %223 = sbr.rel (%p221) target = $region36
      $region35: #{dqn_linear_forward.1} parent=11 // pred_region
        _
      $region36: #{dqn_linear_forward.1} parent=11 // pred_fallthru
        _
    $region12: #{dqn_linear_forward.1} parent=5 // pred_fallthru
      _
    %p224 = scmp.lt.s32.totalorder %s13, 2
    // Predicated region
    $region37: #{dqn_linear_forward.1} parent=5 // pred_check
      %p225 = pneg %p224
    $region38: #{dqn_linear_forward.1} parent=5 // pred_check_branch
      %227 = sbr.rel (%p225) target = $region40
    $region39: #{dqn_linear_forward.1} parent=5 // pred_region
      // Predicated region
      $region41: #{dqn_linear_forward.1} parent=39 // pred_check
        %p228 = pneg %p33
      $region42: #{dqn_linear_forward.1} parent=39 // pred_check_branch
        %230 = sbr.rel (%p228) target = $region44
      $region43: #{dqn_linear_forward.1} parent=39 // pred_region
        %s231 = smul.u32 64, %s13
        %p232 = scmp.lt.s32.totalorder %s231, 127
        %s233 = scalar_select %p232, %s231, 127
        %s234 = smul.addr %s233, 8
        %s235 = scalar_lea.vmem %s0, %s234
        %s236 = smul.u32 64, %s13
      $region44: #{dqn_linear_forward.1} parent=39 // pred_fallthru
        _
    $region40: #{dqn_linear_forward.1} parent=5 // pred_fallthru
      _
    %p237 = scmp.le.s32.totalorder 1, %s13
    %p238 = scmp.lt.s32.totalorder %s13, 3
    %p239 = pnand %p237, %p238
    %p240 = pneg %p239
    // Predicated region
    $region45: #{dqn_linear_forward.1} parent=5 // pred_check
      _
    $region46: #{dqn_linear_forward.1} parent=5 // pred_check_branch
      %242 = sbr.rel (%p239) target = $region48
    $region47: #{dqn_linear_forward.1} parent=5 // pred_region
      %s243 = ssub.s32 %s13, 1
      %s244 = smul.u32 64, %s18
      %p245 = scmp.lt.s32.totalorder %s244, 127
      %s246 = scalar_select %p245, %s244, 127
      %s247 = smul.addr %s246, 8
      %s248 = scalar_lea.vmem %s0, %s247
      %p249 = pneg %p39
      %p250 = pneg %p36
      %p251 = pneg %p60
      %p252 = pneg %p57
      %p253 = pneg %p81
      %p254 = pneg %p78
      %p255 = pneg %p102
      %p256 = pneg %p99
      %p257 = pneg %p123
      %p258 = pneg %p120
      %p259 = pneg %p144
      %p260 = pneg %p141
      %p261 = pneg %p165
      %p262 = pneg %p162
      %p263 = pneg %p191
      %p264 = pneg %p188
      %s265 = smul.u32 64, %s18
      %p266 = scmp.lt.s32.totalorder %s265, 127
      %s267 = scalar_select %p266, %s265, 127
      %s268 = smul.addr %s267, 8
      %s269 = scalar_lea.vmem %s7, %s268
      %s270 = smul.u32 64, %s18
      %p271 = scmp.lt.s32.totalorder %s270, 127
      %s272 = scalar_select %p271, %s270, 127
      %s273 = smul.addr %s272, 8
      %s274 = scalar_lea.vmem %s0, %s273
      %s275 = smul.u32 64, %s18
      %s276 = smul.u32 64, %s18
      %p277 = scmp.lt.s32.totalorder %s276, 127
      %s278 = scalar_select %p277, %s276, 127
      %s279 = smul.addr %s278, 8
      %s280 = scalar_lea.vmem %s7, %s279
      %s281 = smul.u32 64, %s18
      %v282 = vld [vmem:[%s274] sm:$0xff]
      %v283 = vld [vmem:[%s274 + $0x8] sm:$0xff]
      %v284 = vld [vmem:[%s274 + $0x10] sm:$0xff]
      %v285 = vld [vmem:[%s274 + $0x18] sm:$0xff]
      %v286 = vld [vmem:[%s274 + $0x20] sm:$0xff]
      %v287 = vld [vmem:[%s274 + $0x28] sm:$0xff]
      %v288 = vld [vmem:[%s274 + $0x30] sm:$0xff]
      %v289 = vld [vmem:[%s274 + $0x38] sm:$0xff]
      %v290 = vld [vmem:[%s274 + $0x40] sm:$0xff]
      %v291 = vld [vmem:[%s274 + $0x48] sm:$0xff]
      %v292 = vld [vmem:[%s274 + $0x50] sm:$0xff]
      %v293 = vld [vmem:[%s274 + $0x58] sm:$0xff]
      %v294 = vld [vmem:[%s274 + $0x60] sm:$0xff]
      %v295 = vld [vmem:[%s274 + $0x68] sm:$0xff]
      %v296 = vld [vmem:[%s274 + $0x70] sm:$0xff]
      %v297 = vld [vmem:[%s274 + $0x78] sm:$0xff]
      %v298 = vld [vmem:[%s274 + $0x80] sm:$0xff]
      %v299 = vld [vmem:[%s274 + $0x88] sm:$0xff]
      %v300 = vld [vmem:[%s274 + $0x90] sm:$0xff]
      %v301 = vld [vmem:[%s274 + $0x98] sm:$0xff]
      %v302 = vld [vmem:[%s274 + $0xa0] sm:$0xff]
      %v303 = vld [vmem:[%s274 + $0xa8] sm:$0xff]
      %v304 = vld [vmem:[%s274 + $0xb0] sm:$0xff]
      %v305 = vld [vmem:[%s274 + $0xb8] sm:$0xff]
      %v306 = vld [vmem:[%s274 + $0xc0] sm:$0xff]
      %v307 = vld [vmem:[%s274 + $0xc8] sm:$0xff]
      %v308 = vld [vmem:[%s274 + $0xd0] sm:$0xff]
      %v309 = vld [vmem:[%s274 + $0xd8] sm:$0xff]
      %v310 = vld [vmem:[%s274 + $0xe0] sm:$0xff]
      %v311 = vld [vmem:[%s274 + $0xe8] sm:$0xff]
      %v312 = vld [vmem:[%s274 + $0xf0] sm:$0xff]
      %v313 = vld [vmem:[%s274 + $0xf8] sm:$0xff]
      %v314 = vld [vmem:[%s274 + $0x100] sm:$0xff]
      %v315 = vld [vmem:[%s274 + $0x108] sm:$0xff]
      %v316 = vld [vmem:[%s274 + $0x110] sm:$0xff]
      %v317 = vld [vmem:[%s274 + $0x118] sm:$0xff]
      %v318 = vld [vmem:[%s274 + $0x120] sm:$0xff]
      %v319 = vld [vmem:[%s274 + $0x128] sm:$0xff]
      %v320 = vld [vmem:[%s274 + $0x130] sm:$0xff]
      %v321 = vld [vmem:[%s274 + $0x138] sm:$0xff]
      %v322 = vld [vmem:[%s274 + $0x140] sm:$0xff]
      %v323 = vld [vmem:[%s274 + $0x148] sm:$0xff]
      %v324 = vld [vmem:[%s274 + $0x150] sm:$0xff]
      %v325 = vld [vmem:[%s274 + $0x158] sm:$0xff]
      %v326 = vld [vmem:[%s274 + $0x160] sm:$0xff]
      %v327 = vld [vmem:[%s274 + $0x168] sm:$0xff]
      %v328 = vld [vmem:[%s274 + $0x170] sm:$0xff]
      %v329 = vld [vmem:[%s274 + $0x178] sm:$0xff]
      %v330 = vld [vmem:[%s274 + $0x180] sm:$0xff]
      %v331 = vld [vmem:[%s274 + $0x188] sm:$0xff]
      %v332 = vld [vmem:[%s274 + $0x190] sm:$0xff]
      %v333 = vld [vmem:[%s274 + $0x198] sm:$0xff]
      %v334 = vld [vmem:[%s274 + $0x1a0] sm:$0xff]
      %v335 = vld [vmem:[%s274 + $0x1a8] sm:$0xff]
      %v336 = vld [vmem:[%s274 + $0x1b0] sm:$0xff]
      %v337 = vld [vmem:[%s274 + $0x1b8] sm:$0xff]
      %v338 = vld [vmem:[%s274 + $0x1c0] sm:$0xff]
      %v339 = vld [vmem:[%s274 + $0x1c8] sm:$0xff]
      %v340 = vld [vmem:[%s274 + $0x1d0] sm:$0xff]
      %v341 = vld [vmem:[%s274 + $0x1d8] sm:$0xff]
      %v342 = vld [vmem:[%s274 + $0x1e0] sm:$0xff]
      %v343 = vld [vmem:[%s274 + $0x1e8] sm:$0xff]
      %v344 = vld [vmem:[%s274 + $0x1f0] sm:$0xff]
      %v345 = vld [vmem:[%s274 + $0x1f8] sm:$0xff]
      %v346 = vld [vmem:[%s1] sm:$0xf]
      %v347 = vld [vmem:[%s2] sm:$0x1]
      %v349 = vlaneseq
      %v350 = vshrl.u32 %v349, 7
      %v351 = vsub.s32 0, %v350
      %v352 = vrot.slane %v347, %v351
      %vm354 = vcmask 31744
      %v356 = vsel %vm354, %v282, 0
      %v359 = vsel %vm354, %v283, 0
      %v362 = vsel %vm354, %v284, 0
      %v365 = vsel %vm354, %v285, 0
      %v368 = vsel %vm354, %v286, 0
      %v371 = vsel %vm354, %v287, 0
      %v374 = vsel %vm354, %v288, 0
      %v377 = vsel %vm354, %v289, 0
      %v380 = vsel %vm354, %v290, 0
      %v383 = vsel %vm354, %v291, 0
      %v386 = vsel %vm354, %v292, 0
      %v389 = vsel %vm354, %v293, 0
      %v392 = vsel %vm354, %v294, 0
      %v395 = vsel %vm354, %v295, 0
      %v398 = vsel %vm354, %v296, 0
      %v401 = vsel %vm354, %v297, 0
      %v404 = vsel %vm354, %v298, 0
      %v407 = vsel %vm354, %v299, 0
      %v410 = vsel %vm354, %v300, 0
      %v413 = vsel %vm354, %v301, 0
      %v416 = vsel %vm354, %v302, 0
      %v419 = vsel %vm354, %v303, 0
      %v422 = vsel %vm354, %v304, 0
      %v425 = vsel %vm354, %v305, 0
      %v428 = vsel %vm354, %v306, 0
      %v431 = vsel %vm354, %v307, 0
      %v434 = vsel %vm354, %v308, 0
      %v437 = vsel %vm354, %v309, 0
      %v440 = vsel %vm354, %v310, 0
      %v443 = vsel %vm354, %v311, 0
      %v446 = vsel %vm354, %v312, 0
      %v449 = vsel %vm354, %v313, 0
      %v452 = vsel %vm354, %v314, 0
      %v455 = vsel %vm354, %v315, 0
      %v458 = vsel %vm354, %v316, 0
      %v461 = vsel %vm354, %v317, 0
      %v464 = vsel %vm354, %v318, 0
      %v467 = vsel %vm354, %v319, 0
      %v470 = vsel %vm354, %v320, 0
      %v473 = vsel %vm354, %v321, 0
      %v476 = vsel %vm354, %v322, 0
      %v479 = vsel %vm354, %v323, 0
      %v482 = vsel %vm354, %v324, 0
      %v485 = vsel %vm354, %v325, 0
      %v488 = vsel %vm354, %v326, 0
      %v491 = vsel %vm354, %v327, 0
      %v494 = vsel %vm354, %v328, 0
      %v497 = vsel %vm354, %v329, 0
      %v500 = vsel %vm354, %v330, 0
      %v503 = vsel %vm354, %v331, 0
      %v506 = vsel %vm354, %v332, 0
      %v509 = vsel %vm354, %v333, 0
      %v512 = vsel %vm354, %v334, 0
      %v515 = vsel %vm354, %v335, 0
      %v518 = vsel %vm354, %v336, 0
      %v521 = vsel %vm354, %v337, 0
      %v524 = vsel %vm354, %v338, 0
      %v527 = vsel %vm354, %v339, 0
      %v530 = vsel %vm354, %v340, 0
      %v533 = vsel %vm354, %v341, 0
      %v536 = vsel %vm354, %v342, 0
      %v539 = vsel %vm354, %v343, 0
      %v542 = vsel %vm354, %v344, 0
      %v545 = vsel %vm354, %v345, 0
      %vm547 = vcmask 1043456
      %v549 = vsel %vm547, %v346, 0
      %551 = vmatprep.subr.mxu0 0.0
      %552 = vmatpush1.msra.mxu0 %v549
      %553 = vmatprep.subr.mxu0 0.0
      %554 = vmatpush1.msra.mxu0 0.0
      %555 = vmatprep.subr.mxu0 0.0
      %556 = vmatpush1.msra.mxu0 0.0
      %557 = vmatprep.subr.mxu0 0.0
      %558 = vmatpush1.msra.mxu0 0.0
      %559 = vmatprep.subr.mxu0 0.0
      %560 = vmatpush1.msra.mxu0 0.0
      %561 = vmatprep.subr.mxu0 0.0
      %562 = vmatpush1.msra.mxu0 0.0
      %563 = vmatprep.subr.mxu0 0.0
      %564 = vmatpush1.msra.mxu0 0.0
      %565 = vmatprep.subr.mxu0 0.0
      %566 = vmatpush1.msra.mxu0 0.0
      %567 = vmatprep.subr.mxu0 0.0
      %568 = vmatpush1.msra.mxu0 0.0
      %569 = vmatprep.subr.mxu0 0.0
      %570 = vmatpush1.msra.mxu0 0.0
      %571 = vmatprep.subr.mxu0 0.0
      %572 = vmatpush1.msra.mxu0 0.0
      %573 = vmatprep.subr.mxu0 0.0
      %574 = vmatpush1.msra.mxu0 0.0
      %575 = vmatprep.subr.mxu0 0.0
      %576 = vmatpush1.msra.mxu0 0.0
      %577 = vmatprep.subr.mxu0 0.0
      %578 = vmatpush1.msra.mxu0 0.0
      %579 = vmatprep.subr.mxu0 0.0
      %580 = vmatpush1.msra.mxu0 0.0
      %581 = vmatprep.subr.mxu0 0.0
      %582 = vmatpush1.msra.mxu0 0.0
      %583 = vmatprep.subr.mxu0 0.0
      %584 = vmatpush1.msra.mxu0 0.0
      %585 = vmatprep.subr.mxu0 0.0
      %586 = vmatpush1.msra.mxu0 0.0
      %587 = vmatprep.subr.mxu0 0.0
      %588 = vmatpush1.msra.mxu0 0.0
      %589 = vmatprep.subr.mxu0 0.0
      %590 = vmatpush1.msra.mxu0 0.0
      %591 = vmatprep.subr.mxu0 0.0
      %592 = vmatpush1.msra.mxu0 0.0
      %593 = vmatprep.subr.mxu0 0.0
      %594 = vmatpush1.msra.mxu0 0.0
      %595 = vmatprep.subr.mxu0 0.0
      %596 = vmatpush1.msra.mxu0 0.0
      %597 = vmatprep.subr.mxu0 0.0
      %598 = vmatpush1.msra.mxu0 0.0
      %599 = vmatprep.subr.mxu0 0.0
      %600 = vmatpush1.msra.mxu0 0.0
      %601 = vmatprep.subr.mxu0 0.0
      %602 = vmatpush1.msra.mxu0 0.0
      %603 = vmatprep.subr.mxu0 0.0
      %604 = vmatpush1.msra.mxu0 0.0
      %605 = vmatprep.subr.mxu0 0.0
      %606 = vmatpush1.msra.mxu0 0.0
      %607 = vmatprep.subr.mxu0 0.0
      %608 = vmatpush1.msra.mxu0 0.0
      %609 = vmatprep.subr.mxu0 0.0
      %610 = vmatpush1.msra.mxu0 0.0
      %611 = vmatprep.subr.mxu0 0.0
      %612 = vmatpush1.msra.mxu0 0.0
      %613 = vmatprep.subr.mxu0 0.0
      %614 = vmatpush1.msra.mxu0 0.0
      %615 = vmatprep.mubr.f32.mxu0 0.0
      %616 = vmatmul.mubr.f32.gmra.mrb[0].mxu0 %v356
      %v617 = vpop.f32.mrb[0].mxu0
      %v618 = vadd.f32 %v352, %v617
      %v619 = vpop.f32.mrb[0].mxu0
      %620 = vmatprep.mubr.f32.mxu0 0.0
      %621 = vmatmul.mubr.f32.gmra.mrb[0].mxu0 %v359
      %v622 = vpop.f32.mrb[0].mxu0
      %v623 = vadd.f32 %v352, %v622
      %v624 = vpop.f32.mrb[0].mxu0
      %625 = vmatprep.mubr.f32.mxu0 0.0
      %626 = vmatmul.mubr.f32.gmra.mrb[0].mxu0 %v362
      %v627 = vpop.f32.mrb[0].mxu0
      %v628 = vadd.f32 %v352, %v627
      %v629 = vpop.f32.mrb[0].mxu0
      %630 = vmatprep.mubr.f32.mxu0 0.0
      %631 = vmatmul.mubr.f32.gmra.mrb[0].mxu0 %v365
      %v632 = vpop.f32.mrb[0].mxu0
      %v633 = vadd.f32 %v352, %v632
      %v634 = vpop.f32.mrb[0].mxu0
      %635 = vmatprep.mubr.f32.mxu0 0.0
      %636 = vmatmul.mubr.f32.gmra.mrb[0].mxu0 %v368
      %v637 = vpop.f32.mrb[0].mxu0
      %v638 = vadd.f32 %v352, %v637
      %v639 = vpop.f32.mrb[0].mxu0
      %640 = vmatprep.mubr.f32.mxu0 0.0
      %641 = vmatmul.mubr.f32.gmra.mrb[0].mxu0 %v371
      %v642 = vpop.f32.mrb[0].mxu0
      %v643 = vadd.f32 %v352, %v642
      %v644 = vpop.f32.mrb[0].mxu0
      %645 = vmatprep.mubr.f32.mxu0 0.0
      %646 = vmatmul.mubr.f32.gmra.mrb[0].mxu0 %v374
      %v647 = vpop.f32.mrb[0].mxu0
      %v648 = vadd.f32 %v352, %v647
      %v649 = vpop.f32.mrb[0].mxu0
      %650 = vmatprep.mubr.f32.mxu0 0.0
      %651 = vmatmul.mubr.f32.gmra.mrb[0].mxu0 %v377
      %v652 = vpop.f32.mrb[0].mxu0
      %v653 = vadd.f32 %v352, %v652
      %v654 = vpop.f32.mrb[0].mxu0
      %655 = vmatprep.mubr.f32.mxu0 0.0
      %656 = vmatmul.mubr.f32.gmra.mrb[0].mxu0 %v380
      %v657 = vpop.f32.mrb[0].mxu0
      %v658 = vadd.f32 %v352, %v657
      %v659 = vpop.f32.mrb[0].mxu0
      %660 = vmatprep.mubr.f32.mxu0 0.0
      %661 = vmatmul.mubr.f32.gmra.mrb[0].mxu0 %v383
      %v662 = vpop.f32.mrb[0].mxu0
      %v663 = vadd.f32 %v352, %v662
      %v664 = vpop.f32.mrb[0].mxu0
      %665 = vmatprep.mubr.f32.mxu0 0.0
      %666 = vmatmul.mubr.f32.gmra.mrb[0].mxu0 %v386
      %v667 = vpop.f32.mrb[0].mxu0
      %v668 = vadd.f32 %v352, %v667
      %v669 = vpop.f32.mrb[0].mxu0
      %670 = vmatprep.mubr.f32.mxu0 0.0
      %671 = vmatmul.mubr.f32.gmra.mrb[0].mxu0 %v389
      %v672 = vpop.f32.mrb[0].mxu0
      %v673 = vadd.f32 %v352, %v672
      %v674 = vpop.f32.mrb[0].mxu0
      %675 = vmatprep.mubr.f32.mxu0 0.0
      %676 = vmatmul.mubr.f32.gmra.mrb[0].mxu0 %v392
      %v677 = vpop.f32.mrb[0].mxu0
      %v678 = vadd.f32 %v352, %v677
      %v679 = vpop.f32.mrb[0].mxu0
      %680 = vmatprep.mubr.f32.mxu0 0.0
      %681 = vmatmul.mubr.f32.gmra.mrb[0].mxu0 %v395
      %v682 = vpop.f32.mrb[0].mxu0
      %v683 = vadd.f32 %v352, %v682
      %v684 = vpop.f32.mrb[0].mxu0
      %685 = vmatprep.mubr.f32.mxu0 0.0
      %686 = vmatmul.mubr.f32.gmra.mrb[0].mxu0 %v398
      %v687 = vpop.f32.mrb[0].mxu0
      %v688 = vadd.f32 %v352, %v687
      %v689 = vpop.f32.mrb[0].mxu0
      %690 = vmatprep.mubr.f32.mxu0 0.0
      %691 = vmatmul.mubr.f32.gmra.mrb[0].mxu0 %v401
      %v692 = vpop.f32.mrb[0].mxu0
      %v693 = vadd.f32 %v352, %v692
      %v694 = vpop.f32.mrb[0].mxu0
      %695 = vmatprep.mubr.f32.mxu0 0.0
      %696 = vmatmul.mubr.f32.gmra.mrb[0].mxu0 %v404
      %v697 = vpop.f32.mrb[0].mxu0
      %v698 = vadd.f32 %v352, %v697
      %v699 = vpop.f32.mrb[0].mxu0
      %700 = vmatprep.mubr.f32.mxu0 0.0
      %701 = vmatmul.mubr.f32.gmra.mrb[0].mxu0 %v407
      %v702 = vpop.f32.mrb[0].mxu0
      %v703 = vadd.f32 %v352, %v702
      %v704 = vpop.f32.mrb[0].mxu0
      %705 = vmatprep.mubr.f32.mxu0 0.0
      %706 = vmatmul.mubr.f32.gmra.mrb[0].mxu0 %v410
      %v707 = vpop.f32.mrb[0].mxu0
      %v708 = vadd.f32 %v352, %v707
      %v709 = vpop.f32.mrb[0].mxu0
      %710 = vmatprep.mubr.f32.mxu0 0.0
      %711 = vmatmul.mubr.f32.gmra.mrb[0].mxu0 %v413
      %v712 = vpop.f32.mrb[0].mxu0
      %v713 = vadd.f32 %v352, %v712
      %v714 = vpop.f32.mrb[0].mxu0
      %715 = vmatprep.mubr.f32.mxu0 0.0
      %716 = vmatmul.mubr.f32.gmra.mrb[0].mxu0 %v416
      %v717 = vpop.f32.mrb[0].mxu0
      %v718 = vadd.f32 %v352, %v717
      %v719 = vpop.f32.mrb[0].mxu0
      %720 = vmatprep.mubr.f32.mxu0 0.0
      %721 = vmatmul.mubr.f32.gmra.mrb[0].mxu0 %v419
      %v722 = vpop.f32.mrb[0].mxu0
      %v723 = vadd.f32 %v352, %v722
      %v724 = vpop.f32.mrb[0].mxu0
      %725 = vmatprep.mubr.f32.mxu0 0.0
      %726 = vmatmul.mubr.f32.gmra.mrb[0].mxu0 %v422
      %v727 = vpop.f32.mrb[0].mxu0
      %v728 = vadd.f32 %v352, %v727
      %v729 = vpop.f32.mrb[0].mxu0
      %730 = vmatprep.mubr.f32.mxu0 0.0
      %731 = vmatmul.mubr.f32.gmra.mrb[0].mxu0 %v425
      %v732 = vpop.f32.mrb[0].mxu0
      %v733 = vadd.f32 %v352, %v732
      %v734 = vpop.f32.mrb[0].mxu0
      %735 = vmatprep.mubr.f32.mxu0 0.0
      %736 = vmatmul.mubr.f32.gmra.mrb[0].mxu0 %v428
      %v737 = vpop.f32.mrb[0].mxu0
      %v738 = vadd.f32 %v352, %v737
      %v739 = vpop.f32.mrb[0].mxu0
      %740 = vmatprep.mubr.f32.mxu0 0.0
      %741 = vmatmul.mubr.f32.gmra.mrb[0].mxu0 %v431
      %v742 = vpop.f32.mrb[0].mxu0
      %v743 = vadd.f32 %v352, %v742
      %v744 = vpop.f32.mrb[0].mxu0
      %745 = vmatprep.mubr.f32.mxu0 0.0
      %746 = vmatmul.mubr.f32.gmra.mrb[0].mxu0 %v434
      %v747 = vpop.f32.mrb[0].mxu0
      %v748 = vadd.f32 %v352, %v747
      %v749 = vpop.f32.mrb[0].mxu0
      %750 = vmatprep.mubr.f32.mxu0 0.0
      %751 = vmatmul.mubr.f32.gmra.mrb[0].mxu0 %v437
      %v752 = vpop.f32.mrb[0].mxu0
      %v753 = vadd.f32 %v352, %v752
      %v754 = vpop.f32.mrb[0].mxu0
      %755 = vmatprep.mubr.f32.mxu0 0.0
      %756 = vmatmul.mubr.f32.gmra.mrb[0].mxu0 %v440
      %v757 = vpop.f32.mrb[0].mxu0
      %v758 = vadd.f32 %v352, %v757
      %v759 = vpop.f32.mrb[0].mxu0
      %760 = vmatprep.mubr.f32.mxu0 0.0
      %761 = vmatmul.mubr.f32.gmra.mrb[0].mxu0 %v443
      %v762 = vpop.f32.mrb[0].mxu0
      %v763 = vadd.f32 %v352, %v762
      %v764 = vpop.f32.mrb[0].mxu0
      %765 = vmatprep.mubr.f32.mxu0 0.0
      %766 = vmatmul.mubr.f32.gmra.mrb[0].mxu0 %v446
      %v767 = vpop.f32.mrb[0].mxu0
      %v768 = vadd.f32 %v352, %v767
      %v769 = vpop.f32.mrb[0].mxu0
      %770 = vmatprep.mubr.f32.mxu0 0.0
      %771 = vmatmul.mubr.f32.gmra.mrb[0].mxu0 %v449
      %v772 = vpop.f32.mrb[0].mxu0
      %v773 = vadd.f32 %v352, %v772
      %v774 = vpop.f32.mrb[0].mxu0
      %775 = vmatprep.mubr.f32.mxu0 0.0
      %776 = vmatmul.mubr.f32.gmra.mrb[0].mxu0 %v452
      %v777 = vpop.f32.mrb[0].mxu0
      %v778 = vadd.f32 %v352, %v777
      %v779 = vpop.f32.mrb[0].mxu0
      %780 = vmatprep.mubr.f32.mxu0 0.0
      %781 = vmatmul.mubr.f32.gmra.mrb[0].mxu0 %v455
      %v782 = vpop.f32.mrb[0].mxu0
      %v783 = vadd.f32 %v352, %v782
      %v784 = vpop.f32.mrb[0].mxu0
      %785 = vmatprep.mubr.f32.mxu0 0.0
      %786 = vmatmul.mubr.f32.gmra.mrb[0].mxu0 %v458
      %v787 = vpop.f32.mrb[0].mxu0
      %v788 = vadd.f32 %v352, %v787
      %v789 = vpop.f32.mrb[0].mxu0
      %790 = vmatprep.mubr.f32.mxu0 0.0
      %791 = vmatmul.mubr.f32.gmra.mrb[0].mxu0 %v461
      %v792 = vpop.f32.mrb[0].mxu0
      %v793 = vadd.f32 %v352, %v792
      %v794 = vpop.f32.mrb[0].mxu0
      %795 = vmatprep.mubr.f32.mxu0 0.0
      %796 = vmatmul.mubr.f32.gmra.mrb[0].mxu0 %v464
      %v797 = vpop.f32.mrb[0].mxu0
      %v798 = vadd.f32 %v352, %v797
      %v799 = vpop.f32.mrb[0].mxu0
      %800 = vmatprep.mubr.f32.mxu0 0.0
      %801 = vmatmul.mubr.f32.gmra.mrb[0].mxu0 %v467
      %v802 = vpop.f32.mrb[0].mxu0
      %v803 = vadd.f32 %v352, %v802
      %v804 = vpop.f32.mrb[0].mxu0
      %805 = vmatprep.mubr.f32.mxu0 0.0
      %806 = vmatmul.mubr.f32.gmra.mrb[0].mxu0 %v470
      %v807 = vpop.f32.mrb[0].mxu0
      %v808 = vadd.f32 %v352, %v807
      %v809 = vpop.f32.mrb[0].mxu0
      %810 = vmatprep.mubr.f32.mxu0 0.0
      %811 = vmatmul.mubr.f32.gmra.mrb[0].mxu0 %v473
      %v812 = vpop.f32.mrb[0].mxu0
      %v813 = vadd.f32 %v352, %v812
      %v814 = vpop.f32.mrb[0].mxu0
      %815 = vmatprep.mubr.f32.mxu0 0.0
      %816 = vmatmul.mubr.f32.gmra.mrb[0].mxu0 %v476
      %v817 = vpop.f32.mrb[0].mxu0
      %v818 = vadd.f32 %v352, %v817
      %v819 = vpop.f32.mrb[0].mxu0
      %820 = vmatprep.mubr.f32.mxu0 0.0
      %821 = vmatmul.mubr.f32.gmra.mrb[0].mxu0 %v479
      %v822 = vpop.f32.mrb[0].mxu0
      %v823 = vadd.f32 %v352, %v822
      %v824 = vpop.f32.mrb[0].mxu0
      %825 = vmatprep.mubr.f32.mxu0 0.0
      %826 = vmatmul.mubr.f32.gmra.mrb[0].mxu0 %v482
      %v827 = vpop.f32.mrb[0].mxu0
      %v828 = vadd.f32 %v352, %v827
      %v829 = vpop.f32.mrb[0].mxu0
      %830 = vmatprep.mubr.f32.mxu0 0.0
      %831 = vmatmul.mubr.f32.gmra.mrb[0].mxu0 %v485
      %v832 = vpop.f32.mrb[0].mxu0
      %v833 = vadd.f32 %v352, %v832
      %v834 = vpop.f32.mrb[0].mxu0
      %835 = vmatprep.mubr.f32.mxu0 0.0
      %836 = vmatmul.mubr.f32.gmra.mrb[0].mxu0 %v488
      %v837 = vpop.f32.mrb[0].mxu0
      %v838 = vadd.f32 %v352, %v837
      %v839 = vpop.f32.mrb[0].mxu0
      %840 = vmatprep.mubr.f32.mxu0 0.0
      %841 = vmatmul.mubr.f32.gmra.mrb[0].mxu0 %v491
      %v842 = vpop.f32.mrb[0].mxu0
      %v843 = vadd.f32 %v352, %v842
      %v844 = vpop.f32.mrb[0].mxu0
      %845 = vmatprep.mubr.f32.mxu0 0.0
      %846 = vmatmul.mubr.f32.gmra.mrb[0].mxu0 %v494
      %v847 = vpop.f32.mrb[0].mxu0
      %v848 = vadd.f32 %v352, %v847
      %v849 = vpop.f32.mrb[0].mxu0
      %850 = vmatprep.mubr.f32.mxu0 0.0
      %851 = vmatmul.mubr.f32.gmra.mrb[0].mxu0 %v497
      %v852 = vpop.f32.mrb[0].mxu0
      %v853 = vadd.f32 %v352, %v852
      %v854 = vpop.f32.mrb[0].mxu0
      %855 = vmatprep.mubr.f32.mxu0 0.0
      %856 = vmatmul.mubr.f32.gmra.mrb[0].mxu0 %v500
      %v857 = vpop.f32.mrb[0].mxu0
      %v858 = vadd.f32 %v352, %v857
      %v859 = vpop.f32.mrb[0].mxu0
      %860 = vmatprep.mubr.f32.mxu0 0.0
      %861 = vmatmul.mubr.f32.gmra.mrb[0].mxu0 %v503
      %v862 = vpop.f32.mrb[0].mxu0
      %v863 = vadd.f32 %v352, %v862
      %v864 = vpop.f32.mrb[0].mxu0
      %865 = vmatprep.mubr.f32.mxu0 0.0
      %866 = vmatmul.mubr.f32.gmra.mrb[0].mxu0 %v506
      %v867 = vpop.f32.mrb[0].mxu0
      %v868 = vadd.f32 %v352, %v867
      %v869 = vpop.f32.mrb[0].mxu0
      %870 = vmatprep.mubr.f32.mxu0 0.0
      %871 = vmatmul.mubr.f32.gmra.mrb[0].mxu0 %v509
      %v872 = vpop.f32.mrb[0].mxu0
      %v873 = vadd.f32 %v352, %v872
      %v874 = vpop.f32.mrb[0].mxu0
      %875 = vmatprep.mubr.f32.mxu0 0.0
      %876 = vmatmul.mubr.f32.gmra.mrb[0].mxu0 %v512
      %v877 = vpop.f32.mrb[0].mxu0
      %v878 = vadd.f32 %v352, %v877
      %v879 = vpop.f32.mrb[0].mxu0
      %880 = vmatprep.mubr.f32.mxu0 0.0
      %881 = vmatmul.mubr.f32.gmra.mrb[0].mxu0 %v515
      %v882 = vpop.f32.mrb[0].mxu0
      %v883 = vadd.f32 %v352, %v882
      %v884 = vpop.f32.mrb[0].mxu0
      %885 = vmatprep.mubr.f32.mxu0 0.0
      %886 = vmatmul.mubr.f32.gmra.mrb[0].mxu0 %v518
      %v887 = vpop.f32.mrb[0].mxu0
      %v888 = vadd.f32 %v352, %v887
      %v889 = vpop.f32.mrb[0].mxu0
      %890 = vmatprep.mubr.f32.mxu0 0.0
      %891 = vmatmul.mubr.f32.gmra.mrb[0].mxu0 %v521
      %v892 = vpop.f32.mrb[0].mxu0
      %v893 = vadd.f32 %v352, %v892
      %v894 = vpop.f32.mrb[0].mxu0
      %895 = vmatprep.mubr.f32.mxu0 0.0
      %896 = vmatmul.mubr.f32.gmra.mrb[0].mxu0 %v524
      %v897 = vpop.f32.mrb[0].mxu0
      %v898 = vadd.f32 %v352, %v897
      %v899 = vpop.f32.mrb[0].mxu0
      %900 = vmatprep.mubr.f32.mxu0 0.0
      %901 = vmatmul.mubr.f32.gmra.mrb[0].mxu0 %v527
      %v902 = vpop.f32.mrb[0].mxu0
      %v903 = vadd.f32 %v352, %v902
      %v904 = vpop.f32.mrb[0].mxu0
      %905 = vmatprep.mubr.f32.mxu0 0.0
      %906 = vmatmul.mubr.f32.gmra.mrb[0].mxu0 %v530
      %v907 = vpop.f32.mrb[0].mxu0
      %v908 = vadd.f32 %v352, %v907
      %v909 = vpop.f32.mrb[0].mxu0
      %910 = vmatprep.mubr.f32.mxu0 0.0
      %911 = vmatmul.mubr.f32.gmra.mrb[0].mxu0 %v533
      %v912 = vpop.f32.mrb[0].mxu0
      %v913 = vadd.f32 %v352, %v912
      %v914 = vpop.f32.mrb[0].mxu0
      %915 = vmatprep.mubr.f32.mxu0 0.0
      %916 = vmatmul.mubr.f32.gmra.mrb[0].mxu0 %v536
      %v917 = vpop.f32.mrb[0].mxu0
      %v918 = vadd.f32 %v352, %v917
      %v919 = vpop.f32.mrb[0].mxu0
      %920 = vmatprep.mubr.f32.mxu0 0.0
      %921 = vmatmul.mubr.f32.gmra.mrb[0].mxu0 %v539
      %v922 = vpop.f32.mrb[0].mxu0
      %v923 = vadd.f32 %v352, %v922
      %v924 = vpop.f32.mrb[0].mxu0
      %925 = vmatprep.mubr.f32.mxu0 0.0
      %926 = vmatmul.mubr.f32.gmra.mrb[0].mxu0 %v542
      %v927 = vpop.f32.mrb[0].mxu0
      %v928 = vadd.f32 %v352, %v927
      %v929 = vpop.f32.mrb[0].mxu0
      %930 = vmatprep.mubr.f32.mxu0 0.0
      %931 = vmatmul.mubr.f32.gmra.mrb[0].mxu0 %v545
      %v932 = vpop.f32.mrb[0].mxu0
      %v933 = vadd.f32 %v352, %v932
      %v934 = vpop.f32.mrb[0].mxu0
      %935 = vdwg.mxu0
      %v936 = vmax.f32 %v618, 0.0
      %v937 = vmax.f32 %v623, 0.0
      %v938 = vmax.f32 %v628, 0.0
      %v939 = vmax.f32 %v633, 0.0
      %v940 = vmax.f32 %v638, 0.0
      %v941 = vmax.f32 %v643, 0.0
      %v942 = vmax.f32 %v648, 0.0
      %v943 = vmax.f32 %v653, 0.0
      %v944 = vmax.f32 %v658, 0.0
      %v945 = vmax.f32 %v663, 0.0
      %v946 = vmax.f32 %v668, 0.0
      %v947 = vmax.f32 %v673, 0.0
      %v948 = vmax.f32 %v678, 0.0
      %v949 = vmax.f32 %v683, 0.0
      %v950 = vmax.f32 %v688, 0.0
      %v951 = vmax.f32 %v693, 0.0
      %v952 = vmax.f32 %v698, 0.0
      %v953 = vmax.f32 %v703, 0.0
      %v954 = vmax.f32 %v708, 0.0
      %v955 = vmax.f32 %v713, 0.0
      %v956 = vmax.f32 %v718, 0.0
      %v957 = vmax.f32 %v723, 0.0
      %v958 = vmax.f32 %v728, 0.0
      %v959 = vmax.f32 %v733, 0.0
      %v960 = vmax.f32 %v738, 0.0
      %v961 = vmax.f32 %v743, 0.0
      %v962 = vmax.f32 %v748, 0.0
      %v963 = vmax.f32 %v753, 0.0
      %v964 = vmax.f32 %v758, 0.0
      %v965 = vmax.f32 %v763, 0.0
      %v966 = vmax.f32 %v768, 0.0
      %v967 = vmax.f32 %v773, 0.0
      %v968 = vmax.f32 %v778, 0.0
      %v969 = vmax.f32 %v783, 0.0
      %v970 = vmax.f32 %v788, 0.0
      %v971 = vmax.f32 %v793, 0.0
      %v972 = vmax.f32 %v798, 0.0
      %v973 = vmax.f32 %v803, 0.0
      %v974 = vmax.f32 %v808, 0.0
      %v975 = vmax.f32 %v813, 0.0
      %v976 = vmax.f32 %v818, 0.0
      %v977 = vmax.f32 %v823, 0.0
      %v978 = vmax.f32 %v828, 0.0
      %v979 = vmax.f32 %v833, 0.0
      %v980 = vmax.f32 %v838, 0.0
      %v981 = vmax.f32 %v843, 0.0
      %v982 = vmax.f32 %v848, 0.0
      %v983 = vmax.f32 %v853, 0.0
      %v984 = vmax.f32 %v858, 0.0
      %v985 = vmax.f32 %v863, 0.0
      %v986 = vmax.f32 %v868, 0.0
      %v987 = vmax.f32 %v873, 0.0
      %v988 = vmax.f32 %v878, 0.0
      %v989 = vmax.f32 %v883, 0.0
      %v990 = vmax.f32 %v888, 0.0
      %v991 = vmax.f32 %v893, 0.0
      %v992 = vmax.f32 %v898, 0.0
      %v993 = vmax.f32 %v903, 0.0
      %v994 = vmax.f32 %v908, 0.0
      %v995 = vmax.f32 %v913, 0.0
      %v996 = vmax.f32 %v918, 0.0
      %v997 = vmax.f32 %v923, 0.0
      %v998 = vmax.f32 %v928, 0.0
      %v999 = vmax.f32 %v933, 0.0
      %v1000 = vld [vmem:[%s3] sm:$0xff]
      %v1001 = vld [vmem:[%s3 + $0x8] sm:$0xff]
      %v1002 = vld [vmem:[%s3 + $0x10] sm:$0xff]
      %v1003 = vld [vmem:[%s3 + $0x18] sm:$0xff]
      %v1004 = vld [vmem:[%s3 + $0x20] sm:$0xff]
      %v1005 = vld [vmem:[%s3 + $0x28] sm:$0xff]
      %v1006 = vld [vmem:[%s3 + $0x30] sm:$0xff]
      %v1007 = vld [vmem:[%s3 + $0x38] sm:$0xff]
      %v1008 = vld [vmem:[%s3 + $0x40] sm:$0xff]
      %v1009 = vld [vmem:[%s3 + $0x48] sm:$0xff]
      %v1010 = vld [vmem:[%s3 + $0x50] sm:$0xff]
      %v1011 = vld [vmem:[%s3 + $0x58] sm:$0xff]
      %v1012 = vld [vmem:[%s3 + $0x60] sm:$0xff]
      %v1013 = vld [vmem:[%s3 + $0x68] sm:$0xff]
      %v1014 = vld [vmem:[%s3 + $0x70] sm:$0xff]
      %v1015 = vld [vmem:[%s3 + $0x78] sm:$0xff]
      %v1016 = vld [vmem:[%s4] sm:$0x1]
      %v1018 = vlaneseq
      %v1019 = vshrl.u32 %v1018, 7
      %v1020 = vsub.s32 0, %v1019
      %v1021 = vrot.slane %v1016, %v1020
      %1023 = vmatprep.subr.mxu0 0.0
      %1024 = vmatpush1.msra.mxu0 %v1000
      %1025 = vmatprep.subr.mxu0 0.0
      %1026 = vmatpush1.msra.mxu0 %v1001
      %1027 = vmatprep.subr.mxu0 0.0
      %1028 = vmatpush1.msra.mxu0 %v1002
      %1029 = vmatprep.subr.mxu0 0.0
      %1030 = vmatpush1.msra.mxu0 %v1003
      %1031 = vmatprep.subr.mxu0 0.0
      %1032 = vmatpush1.msra.mxu0 %v1004
      %1033 = vmatprep.subr.mxu0 0.0
      %1034 = vmatpush1.msra.mxu0 %v1005
      %1035 = vmatprep.subr.mxu0 0.0
      %1036 = vmatpush1.msra.mxu0 %v1006
      %1037 = vmatprep.subr.mxu0 0.0
      %1038 = vmatpush1.msra.mxu0 %v1007
      %1039 = vmatprep.subr.mxu0 0.0
      %1040 = vmatpush1.msra.mxu0 %v1008
      %1041 = vmatprep.subr.mxu0 0.0
      %1042 = vmatpush1.msra.mxu0 %v1009
      %1043 = vmatprep.subr.mxu0 0.0
      %1044 = vmatpush1.msra.mxu0 %v1010
      %1045 = vmatprep.subr.mxu0 0.0
      %1046 = vmatpush1.msra.mxu0 %v1011
      %1047 = vmatprep.subr.mxu0 0.0
      %1048 = vmatpush1.msra.mxu0 %v1012
      %1049 = vmatprep.subr.mxu0 0.0
      %1050 = vmatpush1.msra.mxu0 %v1013
      %1051 = vmatprep.subr.mxu0 0.0
      %1052 = vmatpush1.msra.mxu0 %v1014
      %1053 = vmatprep.subr.mxu0 0.0
      %1054 = vmatpush1.msra.mxu0 %v1015
      %1055 = vmatprep.subr.mxu0 0.0
      %1056 = vmatpush1.msra.mxu0 0.0
      %1057 = vmatprep.subr.mxu0 0.0
      %1058 = vmatpush1.msra.mxu0 0.0
      %1059 = vmatprep.subr.mxu0 0.0
      %1060 = vmatpush1.msra.mxu0 0.0
      %1061 = vmatprep.subr.mxu0 0.0
      %1062 = vmatpush1.msra.mxu0 0.0
      %1063 = vmatprep.subr.mxu0 0.0
      %1064 = vmatpush1.msra.mxu0 0.0
      %1065 = vmatprep.subr.mxu0 0.0
      %1066 = vmatpush1.msra.mxu0 0.0
      %1067 = vmatprep.subr.mxu0 0.0
      %1068 = vmatpush1.msra.mxu0 0.0
      %1069 = vmatprep.subr.mxu0 0.0
      %1070 = vmatpush1.msra.mxu0 0.0
      %1071 = vmatprep.subr.mxu0 0.0
      %1072 = vmatpush1.msra.mxu0 0.0
      %1073 = vmatprep.subr.mxu0 0.0
      %1074 = vmatpush1.msra.mxu0 0.0
      %1075 = vmatprep.subr.mxu0 0.0
      %1076 = vmatpush1.msra.mxu0 0.0
      %1077 = vmatprep.subr.mxu0 0.0
      %1078 = vmatpush1.msra.mxu0 0.0
      %1079 = vmatprep.subr.mxu0 0.0
      %1080 = vmatpush1.msra.mxu0 0.0
      %1081 = vmatprep.subr.mxu0 0.0
      %1082 = vmatpush1.msra.mxu0 0.0
      %1083 = vmatprep.subr.mxu0 0.0
      %1084 = vmatpush1.msra.mxu0 0.0
      %1085 = vmatprep.subr.mxu0 0.0
      %1086 = vmatpush1.msra.mxu0 0.0
      %1087 = vmatprep.mubr.f32.mxu0 0.0
      %1088 = vmatmul.mubr.f32.gmra.mrb[0].mxu0 %v936
      %v1089 = vpop.f32.mrb[0].mxu0
      %v1090 = vadd.f32 %v1021, %v1089
      %v1091 = vpop.f32.mrb[0].mxu0
      %1092 = vmatprep.mubr.f32.mxu0 0.0
      %1093 = vmatmul.mubr.f32.gmra.mrb[0].mxu0 %v937
      %v1094 = vpop.f32.mrb[0].mxu0
      %v1095 = vadd.f32 %v1021, %v1094
      %v1096 = vpop.f32.mrb[0].mxu0
      %1097 = vmatprep.mubr.f32.mxu0 0.0
      %1098 = vmatmul.mubr.f32.gmra.mrb[0].mxu0 %v938
      %v1099 = vpop.f32.mrb[0].mxu0
      %v1100 = vadd.f32 %v1021, %v1099
      %v1101 = vpop.f32.mrb[0].mxu0
      %1102 = vmatprep.mubr.f32.mxu0 0.0
      %1103 = vmatmul.mubr.f32.gmra.mrb[0].mxu0 %v939
      %v1104 = vpop.f32.mrb[0].mxu0
      %v1105 = vadd.f32 %v1021, %v1104
      %v1106 = vpop.f32.mrb[0].mxu0
      %1107 = vmatprep.mubr.f32.mxu0 0.0
      %1108 = vmatmul.mubr.f32.gmra.mrb[0].mxu0 %v940
      %v1109 = vpop.f32.mrb[0].mxu0
      %v1110 = vadd.f32 %v1021, %v1109
      %v1111 = vpop.f32.mrb[0].mxu0
      %1112 = vmatprep.mubr.f32.mxu0 0.0
      %1113 = vmatmul.mubr.f32.gmra.mrb[0].mxu0 %v941
      %v1114 = vpop.f32.mrb[0].mxu0
      %v1115 = vadd.f32 %v1021, %v1114
      %v1116 = vpop.f32.mrb[0].mxu0
      %1117 = vmatprep.mubr.f32.mxu0 0.0
      %1118 = vmatmul.mubr.f32.gmra.mrb[0].mxu0 %v942
      %v1119 = vpop.f32.mrb[0].mxu0
      %v1120 = vadd.f32 %v1021, %v1119
      %v1121 = vpop.f32.mrb[0].mxu0
      %1122 = vmatprep.mubr.f32.mxu0 0.0
      %1123 = vmatmul.mubr.f32.gmra.mrb[0].mxu0 %v943
      %v1124 = vpop.f32.mrb[0].mxu0
      %v1125 = vadd.f32 %v1021, %v1124
      %v1126 = vpop.f32.mrb[0].mxu0
      %1127 = vmatprep.mubr.f32.mxu0 0.0
      %1128 = vmatmul.mubr.f32.gmra.mrb[0].mxu0 %v944
      %v1129 = vpop.f32.mrb[0].mxu0
      %v1130 = vadd.f32 %v1021, %v1129
      %v1131 = vpop.f32.mrb[0].mxu0
      %1132 = vmatprep.mubr.f32.mxu0 0.0
      %1133 = vmatmul.mubr.f32.gmra.mrb[0].mxu0 %v945
      %v1134 = vpop.f32.mrb[0].mxu0
      %v1135 = vadd.f32 %v1021, %v1134
      %v1136 = vpop.f32.mrb[0].mxu0
      %1137 = vmatprep.mubr.f32.mxu0 0.0
      %1138 = vmatmul.mubr.f32.gmra.mrb[0].mxu0 %v946
      %v1139 = vpop.f32.mrb[0].mxu0
      %v1140 = vadd.f32 %v1021, %v1139
      %v1141 = vpop.f32.mrb[0].mxu0
      %1142 = vmatprep.mubr.f32.mxu0 0.0
      %1143 = vmatmul.mubr.f32.gmra.mrb[0].mxu0 %v947
      %v1144 = vpop.f32.mrb[0].mxu0
      %v1145 = vadd.f32 %v1021, %v1144
      %v1146 = vpop.f32.mrb[0].mxu0
      %1147 = vmatprep.mubr.f32.mxu0 0.0
      %1148 = vmatmul.mubr.f32.gmra.mrb[0].mxu0 %v948
      %v1149 = vpop.f32.mrb[0].mxu0
      %v1150 = vadd.f32 %v1021, %v1149
      %v1151 = vpop.f32.mrb[0].mxu0
      %1152 = vmatprep.mubr.f32.mxu0 0.0
      %1153 = vmatmul.mubr.f32.gmra.mrb[0].mxu0 %v949
      %v1154 = vpop.f32.mrb[0].mxu0
      %v1155 = vadd.f32 %v1021, %v1154
      %v1156 = vpop.f32.mrb[0].mxu0
      %1157 = vmatprep.mubr.f32.mxu0 0.0
      %1158 = vmatmul.mubr.f32.gmra.mrb[0].mxu0 %v950
      %v1159 = vpop.f32.mrb[0].mxu0
      %v1160 = vadd.f32 %v1021, %v1159
      %v1161 = vpop.f32.mrb[0].mxu0
      %1162 = vmatprep.mubr.f32.mxu0 0.0
      %1163 = vmatmul.mubr.f32.gmra.mrb[0].mxu0 %v951
      %v1164 = vpop.f32.mrb[0].mxu0
      %v1165 = vadd.f32 %v1021, %v1164
      %v1166 = vpop.f32.mrb[0].mxu0
      %1167 = vmatprep.mubr.f32.mxu0 0.0
      %1168 = vmatmul.mubr.f32.gmra.mrb[0].mxu0 %v952
      %v1169 = vpop.f32.mrb[0].mxu0
      %v1170 = vadd.f32 %v1021, %v1169
      %v1171 = vpop.f32.mrb[0].mxu0
      %1172 = vmatprep.mubr.f32.mxu0 0.0
      %1173 = vmatmul.mubr.f32.gmra.mrb[0].mxu0 %v953
      %v1174 = vpop.f32.mrb[0].mxu0
      %v1175 = vadd.f32 %v1021, %v1174
      %v1176 = vpop.f32.mrb[0].mxu0
      %1177 = vmatprep.mubr.f32.mxu0 0.0
      %1178 = vmatmul.mubr.f32.gmra.mrb[0].mxu0 %v954
      %v1179 = vpop.f32.mrb[0].mxu0
      %v1180 = vadd.f32 %v1021, %v1179
      %v1181 = vpop.f32.mrb[0].mxu0
      %1182 = vmatprep.mubr.f32.mxu0 0.0
      %1183 = vmatmul.mubr.f32.gmra.mrb[0].mxu0 %v955
      %v1184 = vpop.f32.mrb[0].mxu0
      %v1185 = vadd.f32 %v1021, %v1184
      %v1186 = vpop.f32.mrb[0].mxu0
      %1187 = vmatprep.mubr.f32.mxu0 0.0
      %1188 = vmatmul.mubr.f32.gmra.mrb[0].mxu0 %v956
      %v1189 = vpop.f32.mrb[0].mxu0
      %v1190 = vadd.f32 %v1021, %v1189
      %v1191 = vpop.f32.mrb[0].mxu0
      %1192 = vmatprep.mubr.f32.mxu0 0.0
      %1193 = vmatmul.mubr.f32.gmra.mrb[0].mxu0 %v957
      %v1194 = vpop.f32.mrb[0].mxu0
      %v1195 = vadd.f32 %v1021, %v1194
      %v1196 = vpop.f32.mrb[0].mxu0
      %1197 = vmatprep.mubr.f32.mxu0 0.0
      %1198 = vmatmul.mubr.f32.gmra.mrb[0].mxu0 %v958
      %v1199 = vpop.f32.mrb[0].mxu0
      %v1200 = vadd.f32 %v1021, %v1199
      %v1201 = vpop.f32.mrb[0].mxu0
      %1202 = vmatprep.mubr.f32.mxu0 0.0
      %1203 = vmatmul.mubr.f32.gmra.mrb[0].mxu0 %v959
      %v1204 = vpop.f32.mrb[0].mxu0
      %v1205 = vadd.f32 %v1021, %v1204
      %v1206 = vpop.f32.mrb[0].mxu0
      %1207 = vmatprep.mubr.f32.mxu0 0.0
      %1208 = vmatmul.mubr.f32.gmra.mrb[0].mxu0 %v960
      %v1209 = vpop.f32.mrb[0].mxu0
      %v1210 = vadd.f32 %v1021, %v1209
      %v1211 = vpop.f32.mrb[0].mxu0
      %1212 = vmatprep.mubr.f32.mxu0 0.0
      %1213 = vmatmul.mubr.f32.gmra.mrb[0].mxu0 %v961
      %v1214 = vpop.f32.mrb[0].mxu0
      %v1215 = vadd.f32 %v1021, %v1214
      %v1216 = vpop.f32.mrb[0].mxu0
      %1217 = vmatprep.mubr.f32.mxu0 0.0
      %1218 = vmatmul.mubr.f32.gmra.mrb[0].mxu0 %v962
      %v1219 = vpop.f32.mrb[0].mxu0
      %v1220 = vadd.f32 %v1021, %v1219
      %v1221 = vpop.f32.mrb[0].mxu0
      %1222 = vmatprep.mubr.f32.mxu0 0.0
      %1223 = vmatmul.mubr.f32.gmra.mrb[0].mxu0 %v963
      %v1224 = vpop.f32.mrb[0].mxu0
      %v1225 = vadd.f32 %v1021, %v1224
      %v1226 = vpop.f32.mrb[0].mxu0
      %1227 = vmatprep.mubr.f32.mxu0 0.0
      %1228 = vmatmul.mubr.f32.gmra.mrb[0].mxu0 %v964
      %v1229 = vpop.f32.mrb[0].mxu0
      %v1230 = vadd.f32 %v1021, %v1229
      %v1231 = vpop.f32.mrb[0].mxu0
      %1232 = vmatprep.mubr.f32.mxu0 0.0
      %1233 = vmatmul.mubr.f32.gmra.mrb[0].mxu0 %v965
      %v1234 = vpop.f32.mrb[0].mxu0
      %v1235 = vadd.f32 %v1021, %v1234
      %v1236 = vpop.f32.mrb[0].mxu0
      %1237 = vmatprep.mubr.f32.mxu0 0.0
      %1238 = vmatmul.mubr.f32.gmra.mrb[0].mxu0 %v966
      %v1239 = vpop.f32.mrb[0].mxu0
      %v1240 = vadd.f32 %v1021, %v1239
      %v1241 = vpop.f32.mrb[0].mxu0
      %1242 = vmatprep.mubr.f32.mxu0 0.0
      %1243 = vmatmul.mubr.f32.gmra.mrb[0].mxu0 %v967
      %v1244 = vpop.f32.mrb[0].mxu0
      %v1245 = vadd.f32 %v1021, %v1244
      %v1246 = vpop.f32.mrb[0].mxu0
      %1247 = vmatprep.mubr.f32.mxu0 0.0
      %1248 = vmatmul.mubr.f32.gmra.mrb[0].mxu0 %v968
      %v1249 = vpop.f32.mrb[0].mxu0
      %v1250 = vadd.f32 %v1021, %v1249
      %v1251 = vpop.f32.mrb[0].mxu0
      %1252 = vmatprep.mubr.f32.mxu0 0.0
      %1253 = vmatmul.mubr.f32.gmra.mrb[0].mxu0 %v969
      %v1254 = vpop.f32.mrb[0].mxu0
      %v1255 = vadd.f32 %v1021, %v1254
      %v1256 = vpop.f32.mrb[0].mxu0
      %1257 = vmatprep.mubr.f32.mxu0 0.0
      %1258 = vmatmul.mubr.f32.gmra.mrb[0].mxu0 %v970
      %v1259 = vpop.f32.mrb[0].mxu0
      %v1260 = vadd.f32 %v1021, %v1259
      %v1261 = vpop.f32.mrb[0].mxu0
      %1262 = vmatprep.mubr.f32.mxu0 0.0
      %1263 = vmatmul.mubr.f32.gmra.mrb[0].mxu0 %v971
      %v1264 = vpop.f32.mrb[0].mxu0
      %v1265 = vadd.f32 %v1021, %v1264
      %v1266 = vpop.f32.mrb[0].mxu0
      %1267 = vmatprep.mubr.f32.mxu0 0.0
      %1268 = vmatmul.mubr.f32.gmra.mrb[0].mxu0 %v972
      %v1269 = vpop.f32.mrb[0].mxu0
      %v1270 = vadd.f32 %v1021, %v1269
      %v1271 = vpop.f32.mrb[0].mxu0
      %1272 = vmatprep.mubr.f32.mxu0 0.0
      %1273 = vmatmul.mubr.f32.gmra.mrb[0].mxu0 %v973
      %v1274 = vpop.f32.mrb[0].mxu0
      %v1275 = vadd.f32 %v1021, %v1274
      %v1276 = vpop.f32.mrb[0].mxu0
      %1277 = vmatprep.mubr.f32.mxu0 0.0
      %1278 = vmatmul.mubr.f32.gmra.mrb[0].mxu0 %v974
      %v1279 = vpop.f32.mrb[0].mxu0
      %v1280 = vadd.f32 %v1021, %v1279
      %v1281 = vpop.f32.mrb[0].mxu0
      %1282 = vmatprep.mubr.f32.mxu0 0.0
      %1283 = vmatmul.mubr.f32.gmra.mrb[0].mxu0 %v975
      %v1284 = vpop.f32.mrb[0].mxu0
      %v1285 = vadd.f32 %v1021, %v1284
      %v1286 = vpop.f32.mrb[0].mxu0
      %1287 = vmatprep.mubr.f32.mxu0 0.0
      %1288 = vmatmul.mubr.f32.gmra.mrb[0].mxu0 %v976
      %v1289 = vpop.f32.mrb[0].mxu0
      %v1290 = vadd.f32 %v1021, %v1289
      %v1291 = vpop.f32.mrb[0].mxu0
      %1292 = vmatprep.mubr.f32.mxu0 0.0
      %1293 = vmatmul.mubr.f32.gmra.mrb[0].mxu0 %v977
      %v1294 = vpop.f32.mrb[0].mxu0
      %v1295 = vadd.f32 %v1021, %v1294
      %v1296 = vpop.f32.mrb[0].mxu0
      %1297 = vmatprep.mubr.f32.mxu0 0.0
      %1298 = vmatmul.mubr.f32.gmra.mrb[0].mxu0 %v978
      %v1299 = vpop.f32.mrb[0].mxu0
      %v1300 = vadd.f32 %v1021, %v1299
      %v1301 = vpop.f32.mrb[0].mxu0
      %1302 = vmatprep.mubr.f32.mxu0 0.0
      %1303 = vmatmul.mubr.f32.gmra.mrb[0].mxu0 %v979
      %v1304 = vpop.f32.mrb[0].mxu0
      %v1305 = vadd.f32 %v1021, %v1304
      %v1306 = vpop.f32.mrb[0].mxu0
      %1307 = vmatprep.mubr.f32.mxu0 0.0
      %1308 = vmatmul.mubr.f32.gmra.mrb[0].mxu0 %v980
      %v1309 = vpop.f32.mrb[0].mxu0
      %v1310 = vadd.f32 %v1021, %v1309
      %v1311 = vpop.f32.mrb[0].mxu0
      %1312 = vmatprep.mubr.f32.mxu0 0.0
      %1313 = vmatmul.mubr.f32.gmra.mrb[0].mxu0 %v981
      %v1314 = vpop.f32.mrb[0].mxu0
      %v1315 = vadd.f32 %v1021, %v1314
      %v1316 = vpop.f32.mrb[0].mxu0
      %1317 = vmatprep.mubr.f32.mxu0 0.0
      %1318 = vmatmul.mubr.f32.gmra.mrb[0].mxu0 %v982
      %v1319 = vpop.f32.mrb[0].mxu0
      %v1320 = vadd.f32 %v1021, %v1319
      %v1321 = vpop.f32.mrb[0].mxu0
      %1322 = vmatprep.mubr.f32.mxu0 0.0
      %1323 = vmatmul.mubr.f32.gmra.mrb[0].mxu0 %v983
      %v1324 = vpop.f32.mrb[0].mxu0
      %v1325 = vadd.f32 %v1021, %v1324
      %v1326 = vpop.f32.mrb[0].mxu0
      %1327 = vmatprep.mubr.f32.mxu0 0.0
      %1328 = vmatmul.mubr.f32.gmra.mrb[0].mxu0 %v984
      %v1329 = vpop.f32.mrb[0].mxu0
      %v1330 = vadd.f32 %v1021, %v1329
      %v1331 = vpop.f32.mrb[0].mxu0
      %1332 = vmatprep.mubr.f32.mxu0 0.0
      %1333 = vmatmul.mubr.f32.gmra.mrb[0].mxu0 %v985
      %v1334 = vpop.f32.mrb[0].mxu0
      %v1335 = vadd.f32 %v1021, %v1334
      %v1336 = vpop.f32.mrb[0].mxu0
      %1337 = vmatprep.mubr.f32.mxu0 0.0
      %1338 = vmatmul.mubr.f32.gmra.mrb[0].mxu0 %v986
      %v1339 = vpop.f32.mrb[0].mxu0
      %v1340 = vadd.f32 %v1021, %v1339
      %v1341 = vpop.f32.mrb[0].mxu0
      %1342 = vmatprep.mubr.f32.mxu0 0.0
      %1343 = vmatmul.mubr.f32.gmra.mrb[0].mxu0 %v987
      %v1344 = vpop.f32.mrb[0].mxu0
      %v1345 = vadd.f32 %v1021, %v1344
      %v1346 = vpop.f32.mrb[0].mxu0
      %1347 = vmatprep.mubr.f32.mxu0 0.0
      %1348 = vmatmul.mubr.f32.gmra.mrb[0].mxu0 %v988
      %v1349 = vpop.f32.mrb[0].mxu0
      %v1350 = vadd.f32 %v1021, %v1349
      %v1351 = vpop.f32.mrb[0].mxu0
      %1352 = vmatprep.mubr.f32.mxu0 0.0
      %1353 = vmatmul.mubr.f32.gmra.mrb[0].mxu0 %v989
      %v1354 = vpop.f32.mrb[0].mxu0
      %v1355 = vadd.f32 %v1021, %v1354
      %v1356 = vpop.f32.mrb[0].mxu0
      %1357 = vmatprep.mubr.f32.mxu0 0.0
      %1358 = vmatmul.mubr.f32.gmra.mrb[0].mxu0 %v990
      %v1359 = vpop.f32.mrb[0].mxu0
      %v1360 = vadd.f32 %v1021, %v1359
      %v1361 = vpop.f32.mrb[0].mxu0
      %1362 = vmatprep.mubr.f32.mxu0 0.0
      %1363 = vmatmul.mubr.f32.gmra.mrb[0].mxu0 %v991
      %v1364 = vpop.f32.mrb[0].mxu0
      %v1365 = vadd.f32 %v1021, %v1364
      %v1366 = vpop.f32.mrb[0].mxu0
      %1367 = vmatprep.mubr.f32.mxu0 0.0
      %1368 = vmatmul.mubr.f32.gmra.mrb[0].mxu0 %v992
      %v1369 = vpop.f32.mrb[0].mxu0
      %v1370 = vadd.f32 %v1021, %v1369
      %v1371 = vpop.f32.mrb[0].mxu0
      %1372 = vmatprep.mubr.f32.mxu0 0.0
      %1373 = vmatmul.mubr.f32.gmra.mrb[0].mxu0 %v993
      %v1374 = vpop.f32.mrb[0].mxu0
      %v1375 = vadd.f32 %v1021, %v1374
      %v1376 = vpop.f32.mrb[0].mxu0
      %1377 = vmatprep.mubr.f32.mxu0 0.0
      %1378 = vmatmul.mubr.f32.gmra.mrb[0].mxu0 %v994
      %v1379 = vpop.f32.mrb[0].mxu0
      %v1380 = vadd.f32 %v1021, %v1379
      %v1381 = vpop.f32.mrb[0].mxu0
      %1382 = vmatprep.mubr.f32.mxu0 0.0
      %1383 = vmatmul.mubr.f32.gmra.mrb[0].mxu0 %v995
      %v1384 = vpop.f32.mrb[0].mxu0
      %v1385 = vadd.f32 %v1021, %v1384
      %v1386 = vpop.f32.mrb[0].mxu0
      %1387 = vmatprep.mubr.f32.mxu0 0.0
      %1388 = vmatmul.mubr.f32.gmra.mrb[0].mxu0 %v996
      %v1389 = vpop.f32.mrb[0].mxu0
      %v1390 = vadd.f32 %v1021, %v1389
      %v1391 = vpop.f32.mrb[0].mxu0
      %1392 = vmatprep.mubr.f32.mxu0 0.0
      %1393 = vmatmul.mubr.f32.gmra.mrb[0].mxu0 %v997
      %v1394 = vpop.f32.mrb[0].mxu0
      %v1395 = vadd.f32 %v1021, %v1394
      %v1396 = vpop.f32.mrb[0].mxu0
      %1397 = vmatprep.mubr.f32.mxu0 0.0
      %1398 = vmatmul.mubr.f32.gmra.mrb[0].mxu0 %v998
      %v1399 = vpop.f32.mrb[0].mxu0
      %v1400 = vadd.f32 %v1021, %v1399
      %v1401 = vpop.f32.mrb[0].mxu0
      %1402 = vmatprep.mubr.f32.mxu0 0.0
      %1403 = vmatmul.mubr.f32.gmra.mrb[0].mxu0 %v999
      %v1404 = vpop.f32.mrb[0].mxu0
      %v1405 = vadd.f32 %v1021, %v1404
      %v1406 = vpop.f32.mrb[0].mxu0
      %1407 = vdwg.mxu0
      %v1408 = vmax.f32 %v1090, 0.0
      %v1409 = vmax.f32 %v1095, 0.0
      %v1410 = vmax.f32 %v1100, 0.0
      %v1411 = vmax.f32 %v1105, 0.0
      %v1412 = vmax.f32 %v1110, 0.0
      %v1413 = vmax.f32 %v1115, 0.0
      %v1414 = vmax.f32 %v1120, 0.0
      %v1415 = vmax.f32 %v1125, 0.0
      %v1416 = vmax.f32 %v1130, 0.0
      %v1417 = vmax.f32 %v1135, 0.0
      %v1418 = vmax.f32 %v1140, 0.0
      %v1419 = vmax.f32 %v1145, 0.0
      %v1420 = vmax.f32 %v1150, 0.0
      %v1421 = vmax.f32 %v1155, 0.0
      %v1422 = vmax.f32 %v1160, 0.0
      %v1423 = vmax.f32 %v1165, 0.0
      %v1424 = vmax.f32 %v1170, 0.0
      %v1425 = vmax.f32 %v1175, 0.0
      %v1426 = vmax.f32 %v1180, 0.0
      %v1427 = vmax.f32 %v1185, 0.0
      %v1428 = vmax.f32 %v1190, 0.0
      %v1429 = vmax.f32 %v1195, 0.0
      %v1430 = vmax.f32 %v1200, 0.0
      %v1431 = vmax.f32 %v1205, 0.0
      %v1432 = vmax.f32 %v1210, 0.0
      %v1433 = vmax.f32 %v1215, 0.0
      %v1434 = vmax.f32 %v1220, 0.0
      %v1435 = vmax.f32 %v1225, 0.0
      %v1436 = vmax.f32 %v1230, 0.0
      %v1437 = vmax.f32 %v1235, 0.0
      %v1438 = vmax.f32 %v1240, 0.0
      %v1439 = vmax.f32 %v1245, 0.0
      %v1440 = vmax.f32 %v1250, 0.0
      %v1441 = vmax.f32 %v1255, 0.0
      %v1442 = vmax.f32 %v1260, 0.0
      %v1443 = vmax.f32 %v1265, 0.0
      %v1444 = vmax.f32 %v1270, 0.0
      %v1445 = vmax.f32 %v1275, 0.0
      %v1446 = vmax.f32 %v1280, 0.0
      %v1447 = vmax.f32 %v1285, 0.0
      %v1448 = vmax.f32 %v1290, 0.0
      %v1449 = vmax.f32 %v1295, 0.0
      %v1450 = vmax.f32 %v1300, 0.0
      %v1451 = vmax.f32 %v1305, 0.0
      %v1452 = vmax.f32 %v1310, 0.0
      %v1453 = vmax.f32 %v1315, 0.0
      %v1454 = vmax.f32 %v1320, 0.0
      %v1455 = vmax.f32 %v1325, 0.0
      %v1456 = vmax.f32 %v1330, 0.0
      %v1457 = vmax.f32 %v1335, 0.0
      %v1458 = vmax.f32 %v1340, 0.0
      %v1459 = vmax.f32 %v1345, 0.0
      %v1460 = vmax.f32 %v1350, 0.0
      %v1461 = vmax.f32 %v1355, 0.0
      %v1462 = vmax.f32 %v1360, 0.0
      %v1463 = vmax.f32 %v1365, 0.0
      %v1464 = vmax.f32 %v1370, 0.0
      %v1465 = vmax.f32 %v1375, 0.0
      %v1466 = vmax.f32 %v1380, 0.0
      %v1467 = vmax.f32 %v1385, 0.0
      %v1468 = vmax.f32 %v1390, 0.0
      %v1469 = vmax.f32 %v1395, 0.0
      %v1470 = vmax.f32 %v1400, 0.0
      %v1471 = vmax.f32 %v1405, 0.0
      %v1472 = vld [vmem:[%s5] sm:$0xff]
      %v1473 = vld [vmem:[%s5 + $0x8] sm:$0xff]
      %v1474 = vld [vmem:[%s5 + $0x10] sm:$0xff]
      %v1475 = vld [vmem:[%s5 + $0x18] sm:$0xff]
      %v1476 = vld [vmem:[%s5 + $0x20] sm:$0xff]
      %v1477 = vld [vmem:[%s5 + $0x28] sm:$0xff]
      %v1478 = vld [vmem:[%s5 + $0x30] sm:$0xff]
      %v1479 = vld [vmem:[%s5 + $0x38] sm:$0xff]
      %v1480 = vld [vmem:[%s5 + $0x40] sm:$0xff]
      %v1481 = vld [vmem:[%s5 + $0x48] sm:$0xff]
      %v1482 = vld [vmem:[%s5 + $0x50] sm:$0xff]
      %v1483 = vld [vmem:[%s5 + $0x58] sm:$0xff]
      %v1484 = vld [vmem:[%s5 + $0x60] sm:$0xff]
      %v1485 = vld [vmem:[%s5 + $0x68] sm:$0xff]
      %v1486 = vld [vmem:[%s5 + $0x70] sm:$0xff]
      %v1487 = vld [vmem:[%s5 + $0x78] sm:$0xff]
      %v1488 = vld [vmem:[%s6] sm:$0x1]
      %v1490 = vlaneseq
      %v1491 = vshrl.u32 %v1490, 7
      %v1492 = vsub.s32 0, %v1491
      %v1493 = vrot.slane %v1488, %v1492
      %1495 = vmatprep.subr.mxu0 0.0
      %1496 = vmatpush1.msra.mxu0 %v1472
      %1497 = vmatprep.subr.mxu0 0.0
      %1498 = vmatpush1.msra.mxu0 %v1473
      %1499 = vmatprep.subr.mxu0 0.0
      %1500 = vmatpush1.msra.mxu0 %v1474
      %1501 = vmatprep.subr.mxu0 0.0
      %1502 = vmatpush1.msra.mxu0 %v1475
      %1503 = vmatprep.subr.mxu0 0.0
      %1504 = vmatpush1.msra.mxu0 %v1476
      %1505 = vmatprep.subr.mxu0 0.0
      %1506 = vmatpush1.msra.mxu0 %v1477
      %1507 = vmatprep.subr.mxu0 0.0
      %1508 = vmatpush1.msra.mxu0 %v1478
      %1509 = vmatprep.subr.mxu0 0.0
      %1510 = vmatpush1.msra.mxu0 %v1479
      %1511 = vmatprep.subr.mxu0 0.0
      %1512 = vmatpush1.msra.mxu0 %v1480
      %1513 = vmatprep.subr.mxu0 0.0
      %1514 = vmatpush1.msra.mxu0 %v1481
      %1515 = vmatprep.subr.mxu0 0.0
      %1516 = vmatpush1.msra.mxu0 %v1482
      %1517 = vmatprep.subr.mxu0 0.0
      %1518 = vmatpush1.msra.mxu0 %v1483
      %1519 = vmatprep.subr.mxu0 0.0
      %1520 = vmatpush1.msra.mxu0 %v1484
      %1521 = vmatprep.subr.mxu0 0.0
      %1522 = vmatpush1.msra.mxu0 %v1485
      %1523 = vmatprep.subr.mxu0 0.0
      %1524 = vmatpush1.msra.mxu0 %v1486
      %1525 = vmatprep.subr.mxu0 0.0
      %1526 = vmatpush1.msra.mxu0 %v1487
      %1527 = vmatprep.subr.mxu0 0.0
      %1528 = vmatpush1.msra.mxu0 0.0
      %1529 = vmatprep.subr.mxu0 0.0
      %1530 = vmatpush1.msra.mxu0 0.0
      %1531 = vmatprep.subr.mxu0 0.0
      %1532 = vmatpush1.msra.mxu0 0.0
      %1533 = vmatprep.subr.mxu0 0.0
      %1534 = vmatpush1.msra.mxu0 0.0
      %1535 = vmatprep.subr.mxu0 0.0
      %1536 = vmatpush1.msra.mxu0 0.0
      %1537 = vmatprep.subr.mxu0 0.0
      %1538 = vmatpush1.msra.mxu0 0.0
      %1539 = vmatprep.subr.mxu0 0.0
      %1540 = vmatpush1.msra.mxu0 0.0
      %1541 = vmatprep.subr.mxu0 0.0
      %1542 = vmatpush1.msra.mxu0 0.0
      %1543 = vmatprep.subr.mxu0 0.0
      %1544 = vmatpush1.msra.mxu0 0.0
      %1545 = vmatprep.subr.mxu0 0.0
      %1546 = vmatpush1.msra.mxu0 0.0
      %1547 = vmatprep.subr.mxu0 0.0
      %1548 = vmatpush1.msra.mxu0 0.0
      %1549 = vmatprep.subr.mxu0 0.0
      %1550 = vmatpush1.msra.mxu0 0.0
      %1551 = vmatprep.subr.mxu0 0.0
      %1552 = vmatpush1.msra.mxu0 0.0
      %1553 = vmatprep.subr.mxu0 0.0
      %1554 = vmatpush1.msra.mxu0 0.0
      %1555 = vmatprep.subr.mxu0 0.0
      %1556 = vmatpush1.msra.mxu0 0.0
      %1557 = vmatprep.subr.mxu0 0.0
      %1558 = vmatpush1.msra.mxu0 0.0
      %1559 = vmatprep.mubr.f32.mxu0 0.0
      %1560 = vmatmul.mubr.f32.gmra.mrb[0].mxu0 %v1408
      %v1561 = vpop.f32.mrb[0].mxu0
      %v1562 = vadd.f32 %v1493, %v1561
      %v1563 = vpop.f32.mrb[0].mxu0
      %1564 = vmatprep.mubr.f32.mxu0 0.0
      %1565 = vmatmul.mubr.f32.gmra.mrb[0].mxu0 %v1409
      %v1566 = vpop.f32.mrb[0].mxu0
      %v1567 = vadd.f32 %v1493, %v1566
      %v1568 = vpop.f32.mrb[0].mxu0
      %1569 = vmatprep.mubr.f32.mxu0 0.0
      %1570 = vmatmul.mubr.f32.gmra.mrb[0].mxu0 %v1410
      %v1571 = vpop.f32.mrb[0].mxu0
      %v1572 = vadd.f32 %v1493, %v1571
      %v1573 = vpop.f32.mrb[0].mxu0
      %1574 = vmatprep.mubr.f32.mxu0 0.0
      %1575 = vmatmul.mubr.f32.gmra.mrb[0].mxu0 %v1411
      %v1576 = vpop.f32.mrb[0].mxu0
      %v1577 = vadd.f32 %v1493, %v1576
      %v1578 = vpop.f32.mrb[0].mxu0
      %1579 = vmatprep.mubr.f32.mxu0 0.0
      %1580 = vmatmul.mubr.f32.gmra.mrb[0].mxu0 %v1412
      %v1581 = vpop.f32.mrb[0].mxu0
      %v1582 = vadd.f32 %v1493, %v1581
      %v1583 = vpop.f32.mrb[0].mxu0
      %1584 = vmatprep.mubr.f32.mxu0 0.0
      %1585 = vmatmul.mubr.f32.gmra.mrb[0].mxu0 %v1413
      %v1586 = vpop.f32.mrb[0].mxu0
      %v1587 = vadd.f32 %v1493, %v1586
      %v1588 = vpop.f32.mrb[0].mxu0
      %1589 = vmatprep.mubr.f32.mxu0 0.0
      %1590 = vmatmul.mubr.f32.gmra.mrb[0].mxu0 %v1414
      %v1591 = vpop.f32.mrb[0].mxu0
      %v1592 = vadd.f32 %v1493, %v1591
      %v1593 = vpop.f32.mrb[0].mxu0
      %1594 = vmatprep.mubr.f32.mxu0 0.0
      %1595 = vmatmul.mubr.f32.gmra.mrb[0].mxu0 %v1415
      %v1596 = vpop.f32.mrb[0].mxu0
      %v1597 = vadd.f32 %v1493, %v1596
      %v1598 = vpop.f32.mrb[0].mxu0
      %1599 = vmatprep.mubr.f32.mxu0 0.0
      %1600 = vmatmul.mubr.f32.gmra.mrb[0].mxu0 %v1416
      %v1601 = vpop.f32.mrb[0].mxu0
      %v1602 = vadd.f32 %v1493, %v1601
      %v1603 = vpop.f32.mrb[0].mxu0
      %1604 = vmatprep.mubr.f32.mxu0 0.0
      %1605 = vmatmul.mubr.f32.gmra.mrb[0].mxu0 %v1417
      %v1606 = vpop.f32.mrb[0].mxu0
      %v1607 = vadd.f32 %v1493, %v1606
      %v1608 = vpop.f32.mrb[0].mxu0
      %1609 = vmatprep.mubr.f32.mxu0 0.0
      %1610 = vmatmul.mubr.f32.gmra.mrb[0].mxu0 %v1418
      %v1611 = vpop.f32.mrb[0].mxu0
      %v1612 = vadd.f32 %v1493, %v1611
      %v1613 = vpop.f32.mrb[0].mxu0
      %1614 = vmatprep.mubr.f32.mxu0 0.0
      %1615 = vmatmul.mubr.f32.gmra.mrb[0].mxu0 %v1419
      %v1616 = vpop.f32.mrb[0].mxu0
      %v1617 = vadd.f32 %v1493, %v1616
      %v1618 = vpop.f32.mrb[0].mxu0
      %1619 = vmatprep.mubr.f32.mxu0 0.0
      %1620 = vmatmul.mubr.f32.gmra.mrb[0].mxu0 %v1420
      %v1621 = vpop.f32.mrb[0].mxu0
      %v1622 = vadd.f32 %v1493, %v1621
      %v1623 = vpop.f32.mrb[0].mxu0
      %1624 = vmatprep.mubr.f32.mxu0 0.0
      %1625 = vmatmul.mubr.f32.gmra.mrb[0].mxu0 %v1421
      %v1626 = vpop.f32.mrb[0].mxu0
      %v1627 = vadd.f32 %v1493, %v1626
      %v1628 = vpop.f32.mrb[0].mxu0
      %1629 = vmatprep.mubr.f32.mxu0 0.0
      %1630 = vmatmul.mubr.f32.gmra.mrb[0].mxu0 %v1422
      %v1631 = vpop.f32.mrb[0].mxu0
      %v1632 = vadd.f32 %v1493, %v1631
      %v1633 = vpop.f32.mrb[0].mxu0
      %1634 = vmatprep.mubr.f32.mxu0 0.0
      %1635 = vmatmul.mubr.f32.gmra.mrb[0].mxu0 %v1423
      %v1636 = vpop.f32.mrb[0].mxu0
      %v1637 = vadd.f32 %v1493, %v1636
      %v1638 = vpop.f32.mrb[0].mxu0
      %1639 = vmatprep.mubr.f32.mxu0 0.0
      %1640 = vmatmul.mubr.f32.gmra.mrb[0].mxu0 %v1424
      %v1641 = vpop.f32.mrb[0].mxu0
      %v1642 = vadd.f32 %v1493, %v1641
      %v1643 = vpop.f32.mrb[0].mxu0
      %1644 = vmatprep.mubr.f32.mxu0 0.0
      %1645 = vmatmul.mubr.f32.gmra.mrb[0].mxu0 %v1425
      %v1646 = vpop.f32.mrb[0].mxu0
      %v1647 = vadd.f32 %v1493, %v1646
      %v1648 = vpop.f32.mrb[0].mxu0
      %1649 = vmatprep.mubr.f32.mxu0 0.0
      %1650 = vmatmul.mubr.f32.gmra.mrb[0].mxu0 %v1426
      %v1651 = vpop.f32.mrb[0].mxu0
      %v1652 = vadd.f32 %v1493, %v1651
      %v1653 = vpop.f32.mrb[0].mxu0
      %1654 = vmatprep.mubr.f32.mxu0 0.0
      %1655 = vmatmul.mubr.f32.gmra.mrb[0].mxu0 %v1427
      %v1656 = vpop.f32.mrb[0].mxu0
      %v1657 = vadd.f32 %v1493, %v1656
      %v1658 = vpop.f32.mrb[0].mxu0
      %1659 = vmatprep.mubr.f32.mxu0 0.0
      %1660 = vmatmul.mubr.f32.gmra.mrb[0].mxu0 %v1428
      %v1661 = vpop.f32.mrb[0].mxu0
      %v1662 = vadd.f32 %v1493, %v1661
      %v1663 = vpop.f32.mrb[0].mxu0
      %1664 = vmatprep.mubr.f32.mxu0 0.0
      %1665 = vmatmul.mubr.f32.gmra.mrb[0].mxu0 %v1429
      %v1666 = vpop.f32.mrb[0].mxu0
      %v1667 = vadd.f32 %v1493, %v1666
      %v1668 = vpop.f32.mrb[0].mxu0
      %1669 = vmatprep.mubr.f32.mxu0 0.0
      %1670 = vmatmul.mubr.f32.gmra.mrb[0].mxu0 %v1430
      %v1671 = vpop.f32.mrb[0].mxu0
      %v1672 = vadd.f32 %v1493, %v1671
      %v1673 = vpop.f32.mrb[0].mxu0
      %1674 = vmatprep.mubr.f32.mxu0 0.0
      %1675 = vmatmul.mubr.f32.gmra.mrb[0].mxu0 %v1431
      %v1676 = vpop.f32.mrb[0].mxu0
      %v1677 = vadd.f32 %v1493, %v1676
      %v1678 = vpop.f32.mrb[0].mxu0
      %1679 = vmatprep.mubr.f32.mxu0 0.0
      %1680 = vmatmul.mubr.f32.gmra.mrb[0].mxu0 %v1432
      %v1681 = vpop.f32.mrb[0].mxu0
      %v1682 = vadd.f32 %v1493, %v1681
      %v1683 = vpop.f32.mrb[0].mxu0
      %1684 = vmatprep.mubr.f32.mxu0 0.0
      %1685 = vmatmul.mubr.f32.gmra.mrb[0].mxu0 %v1433
      %v1686 = vpop.f32.mrb[0].mxu0
      %v1687 = vadd.f32 %v1493, %v1686
      %v1688 = vpop.f32.mrb[0].mxu0
      %1689 = vmatprep.mubr.f32.mxu0 0.0
      %1690 = vmatmul.mubr.f32.gmra.mrb[0].mxu0 %v1434
      %v1691 = vpop.f32.mrb[0].mxu0
      %v1692 = vadd.f32 %v1493, %v1691
      %v1693 = vpop.f32.mrb[0].mxu0
      %1694 = vmatprep.mubr.f32.mxu0 0.0
      %1695 = vmatmul.mubr.f32.gmra.mrb[0].mxu0 %v1435
      %v1696 = vpop.f32.mrb[0].mxu0
      %v1697 = vadd.f32 %v1493, %v1696
      %v1698 = vpop.f32.mrb[0].mxu0
      %1699 = vmatprep.mubr.f32.mxu0 0.0
      %1700 = vmatmul.mubr.f32.gmra.mrb[0].mxu0 %v1436
      %v1701 = vpop.f32.mrb[0].mxu0
      %v1702 = vadd.f32 %v1493, %v1701
      %v1703 = vpop.f32.mrb[0].mxu0
      %1704 = vmatprep.mubr.f32.mxu0 0.0
      %1705 = vmatmul.mubr.f32.gmra.mrb[0].mxu0 %v1437
      %v1706 = vpop.f32.mrb[0].mxu0
      %v1707 = vadd.f32 %v1493, %v1706
      %v1708 = vpop.f32.mrb[0].mxu0
      %1709 = vmatprep.mubr.f32.mxu0 0.0
      %1710 = vmatmul.mubr.f32.gmra.mrb[0].mxu0 %v1438
      %v1711 = vpop.f32.mrb[0].mxu0
      %v1712 = vadd.f32 %v1493, %v1711
      %v1713 = vpop.f32.mrb[0].mxu0
      %1714 = vmatprep.mubr.f32.mxu0 0.0
      %1715 = vmatmul.mubr.f32.gmra.mrb[0].mxu0 %v1439
      %v1716 = vpop.f32.mrb[0].mxu0
      %v1717 = vadd.f32 %v1493, %v1716
      %v1718 = vpop.f32.mrb[0].mxu0
      %1719 = vmatprep.mubr.f32.mxu0 0.0
      %1720 = vmatmul.mubr.f32.gmra.mrb[0].mxu0 %v1440
      %v1721 = vpop.f32.mrb[0].mxu0
      %v1722 = vadd.f32 %v1493, %v1721
      %v1723 = vpop.f32.mrb[0].mxu0
      %1724 = vmatprep.mubr.f32.mxu0 0.0
      %1725 = vmatmul.mubr.f32.gmra.mrb[0].mxu0 %v1441
      %v1726 = vpop.f32.mrb[0].mxu0
      %v1727 = vadd.f32 %v1493, %v1726
      %v1728 = vpop.f32.mrb[0].mxu0
      %1729 = vmatprep.mubr.f32.mxu0 0.0
      %1730 = vmatmul.mubr.f32.gmra.mrb[0].mxu0 %v1442
      %v1731 = vpop.f32.mrb[0].mxu0
      %v1732 = vadd.f32 %v1493, %v1731
      %v1733 = vpop.f32.mrb[0].mxu0
      %1734 = vmatprep.mubr.f32.mxu0 0.0
      %1735 = vmatmul.mubr.f32.gmra.mrb[0].mxu0 %v1443
      %v1736 = vpop.f32.mrb[0].mxu0
      %v1737 = vadd.f32 %v1493, %v1736
      %v1738 = vpop.f32.mrb[0].mxu0
      %1739 = vmatprep.mubr.f32.mxu0 0.0
      %1740 = vmatmul.mubr.f32.gmra.mrb[0].mxu0 %v1444
      %v1741 = vpop.f32.mrb[0].mxu0
      %v1742 = vadd.f32 %v1493, %v1741
      %v1743 = vpop.f32.mrb[0].mxu0
      %1744 = vmatprep.mubr.f32.mxu0 0.0
      %1745 = vmatmul.mubr.f32.gmra.mrb[0].mxu0 %v1445
      %v1746 = vpop.f32.mrb[0].mxu0
      %v1747 = vadd.f32 %v1493, %v1746
      %v1748 = vpop.f32.mrb[0].mxu0
      %1749 = vmatprep.mubr.f32.mxu0 0.0
      %1750 = vmatmul.mubr.f32.gmra.mrb[0].mxu0 %v1446
      %v1751 = vpop.f32.mrb[0].mxu0
      %v1752 = vadd.f32 %v1493, %v1751
      %v1753 = vpop.f32.mrb[0].mxu0
      %1754 = vmatprep.mubr.f32.mxu0 0.0
      %1755 = vmatmul.mubr.f32.gmra.mrb[0].mxu0 %v1447
      %v1756 = vpop.f32.mrb[0].mxu0
      %v1757 = vadd.f32 %v1493, %v1756
      %v1758 = vpop.f32.mrb[0].mxu0
      %1759 = vmatprep.mubr.f32.mxu0 0.0
      %1760 = vmatmul.mubr.f32.gmra.mrb[0].mxu0 %v1448
      %v1761 = vpop.f32.mrb[0].mxu0
      %v1762 = vadd.f32 %v1493, %v1761
      %v1763 = vpop.f32.mrb[0].mxu0
      %1764 = vmatprep.mubr.f32.mxu0 0.0
      %1765 = vmatmul.mubr.f32.gmra.mrb[0].mxu0 %v1449
      %v1766 = vpop.f32.mrb[0].mxu0
      %v1767 = vadd.f32 %v1493, %v1766
      %v1768 = vpop.f32.mrb[0].mxu0
      %1769 = vmatprep.mubr.f32.mxu0 0.0
      %1770 = vmatmul.mubr.f32.gmra.mrb[0].mxu0 %v1450
      %v1771 = vpop.f32.mrb[0].mxu0
      %v1772 = vadd.f32 %v1493, %v1771
      %v1773 = vpop.f32.mrb[0].mxu0
      %1774 = vmatprep.mubr.f32.mxu0 0.0
      %1775 = vmatmul.mubr.f32.gmra.mrb[0].mxu0 %v1451
      %v1776 = vpop.f32.mrb[0].mxu0
      %v1777 = vadd.f32 %v1493, %v1776
      %v1778 = vpop.f32.mrb[0].mxu0
      %1779 = vmatprep.mubr.f32.mxu0 0.0
      %1780 = vmatmul.mubr.f32.gmra.mrb[0].mxu0 %v1452
      %v1781 = vpop.f32.mrb[0].mxu0
      %v1782 = vadd.f32 %v1493, %v1781
      %v1783 = vpop.f32.mrb[0].mxu0
      %1784 = vmatprep.mubr.f32.mxu0 0.0
      %1785 = vmatmul.mubr.f32.gmra.mrb[0].mxu0 %v1453
      %v1786 = vpop.f32.mrb[0].mxu0
      %v1787 = vadd.f32 %v1493, %v1786
      %v1788 = vpop.f32.mrb[0].mxu0
      %1789 = vmatprep.mubr.f32.mxu0 0.0
      %1790 = vmatmul.mubr.f32.gmra.mrb[0].mxu0 %v1454
      %v1791 = vpop.f32.mrb[0].mxu0
      %v1792 = vadd.f32 %v1493, %v1791
      %v1793 = vpop.f32.mrb[0].mxu0
      %1794 = vmatprep.mubr.f32.mxu0 0.0
      %1795 = vmatmul.mubr.f32.gmra.mrb[0].mxu0 %v1455
      %v1796 = vpop.f32.mrb[0].mxu0
      %v1797 = vadd.f32 %v1493, %v1796
      %v1798 = vpop.f32.mrb[0].mxu0
      %1799 = vmatprep.mubr.f32.mxu0 0.0
      %1800 = vmatmul.mubr.f32.gmra.mrb[0].mxu0 %v1456
      %v1801 = vpop.f32.mrb[0].mxu0
      %v1802 = vadd.f32 %v1493, %v1801
      %v1803 = vpop.f32.mrb[0].mxu0
      %1804 = vmatprep.mubr.f32.mxu0 0.0
      %1805 = vmatmul.mubr.f32.gmra.mrb[0].mxu0 %v1457
      %v1806 = vpop.f32.mrb[0].mxu0
      %v1807 = vadd.f32 %v1493, %v1806
      %v1808 = vpop.f32.mrb[0].mxu0
      %1809 = vmatprep.mubr.f32.mxu0 0.0
      %1810 = vmatmul.mubr.f32.gmra.mrb[0].mxu0 %v1458
      %v1811 = vpop.f32.mrb[0].mxu0
      %v1812 = vadd.f32 %v1493, %v1811
      %v1813 = vpop.f32.mrb[0].mxu0
      %1814 = vmatprep.mubr.f32.mxu0 0.0
      %1815 = vmatmul.mubr.f32.gmra.mrb[0].mxu0 %v1459
      %v1816 = vpop.f32.mrb[0].mxu0
      %v1817 = vadd.f32 %v1493, %v1816
      %v1818 = vpop.f32.mrb[0].mxu0
      %1819 = vmatprep.mubr.f32.mxu0 0.0
      %1820 = vmatmul.mubr.f32.gmra.mrb[0].mxu0 %v1460
      %v1821 = vpop.f32.mrb[0].mxu0
      %v1822 = vadd.f32 %v1493, %v1821
      %v1823 = vpop.f32.mrb[0].mxu0
      %1824 = vmatprep.mubr.f32.mxu0 0.0
      %1825 = vmatmul.mubr.f32.gmra.mrb[0].mxu0 %v1461
      %v1826 = vpop.f32.mrb[0].mxu0
      %v1827 = vadd.f32 %v1493, %v1826
      %v1828 = vpop.f32.mrb[0].mxu0
      %1829 = vmatprep.mubr.f32.mxu0 0.0
      %1830 = vmatmul.mubr.f32.gmra.mrb[0].mxu0 %v1462
      %v1831 = vpop.f32.mrb[0].mxu0
      %v1832 = vadd.f32 %v1493, %v1831
      %v1833 = vpop.f32.mrb[0].mxu0
      %1834 = vmatprep.mubr.f32.mxu0 0.0
      %1835 = vmatmul.mubr.f32.gmra.mrb[0].mxu0 %v1463
      %v1836 = vpop.f32.mrb[0].mxu0
      %v1837 = vadd.f32 %v1493, %v1836
      %v1838 = vpop.f32.mrb[0].mxu0
      %1839 = vmatprep.mubr.f32.mxu0 0.0
      %1840 = vmatmul.mubr.f32.gmra.mrb[0].mxu0 %v1464
      %v1841 = vpop.f32.mrb[0].mxu0
      %v1842 = vadd.f32 %v1493, %v1841
      %v1843 = vpop.f32.mrb[0].mxu0
      %1844 = vmatprep.mubr.f32.mxu0 0.0
      %1845 = vmatmul.mubr.f32.gmra.mrb[0].mxu0 %v1465
      %v1846 = vpop.f32.mrb[0].mxu0
      %v1847 = vadd.f32 %v1493, %v1846
      %v1848 = vpop.f32.mrb[0].mxu0
      %1849 = vmatprep.mubr.f32.mxu0 0.0
      %1850 = vmatmul.mubr.f32.gmra.mrb[0].mxu0 %v1466
      %v1851 = vpop.f32.mrb[0].mxu0
      %v1852 = vadd.f32 %v1493, %v1851
      %v1853 = vpop.f32.mrb[0].mxu0
      %1854 = vmatprep.mubr.f32.mxu0 0.0
      %1855 = vmatmul.mubr.f32.gmra.mrb[0].mxu0 %v1467
      %v1856 = vpop.f32.mrb[0].mxu0
      %v1857 = vadd.f32 %v1493, %v1856
      %v1858 = vpop.f32.mrb[0].mxu0
      %1859 = vmatprep.mubr.f32.mxu0 0.0
      %1860 = vmatmul.mubr.f32.gmra.mrb[0].mxu0 %v1468
      %v1861 = vpop.f32.mrb[0].mxu0
      %v1862 = vadd.f32 %v1493, %v1861
      %v1863 = vpop.f32.mrb[0].mxu0
      %1864 = vmatprep.mubr.f32.mxu0 0.0
      %1865 = vmatmul.mubr.f32.gmra.mrb[0].mxu0 %v1469
      %v1866 = vpop.f32.mrb[0].mxu0
      %v1867 = vadd.f32 %v1493, %v1866
      %v1868 = vpop.f32.mrb[0].mxu0
      %1869 = vmatprep.mubr.f32.mxu0 0.0
      %1870 = vmatmul.mubr.f32.gmra.mrb[0].mxu0 %v1470
      %v1871 = vpop.f32.mrb[0].mxu0
      %v1872 = vadd.f32 %v1493, %v1871
      %v1873 = vpop.f32.mrb[0].mxu0
      %1874 = vmatprep.mubr.f32.mxu0 0.0
      %1875 = vmatmul.mubr.f32.gmra.mrb[0].mxu0 %v1471
      %v1876 = vpop.f32.mrb[0].mxu0
      %v1877 = vadd.f32 %v1493, %v1876
      %v1878 = vpop.f32.mrb[0].mxu0
      %1879 = vdwg.mxu0
      %vm1880 = vcmask 15360
      %1881 = vst.msk [vmem:[%s280] sm:$0xff] %vm1880, %v1562
      %1882 = vst.msk [vmem:[%s280 + $0x8] sm:$0xff] %vm1880, %v1567
      %1883 = vst.msk [vmem:[%s280 + $0x10] sm:$0xff] %vm1880, %v1572
      %1884 = vst.msk [vmem:[%s280 + $0x18] sm:$0xff] %vm1880, %v1577
      %1885 = vst.msk [vmem:[%s280 + $0x20] sm:$0xff] %vm1880, %v1582
      %1886 = vst.msk [vmem:[%s280 + $0x28] sm:$0xff] %vm1880, %v1587
      %1887 = vst.msk [vmem:[%s280 + $0x30] sm:$0xff] %vm1880, %v1592
      %1888 = vst.msk [vmem:[%s280 + $0x38] sm:$0xff] %vm1880, %v1597
      %1889 = vst.msk [vmem:[%s280 + $0x40] sm:$0xff] %vm1880, %v1602
      %1890 = vst.msk [vmem:[%s280 + $0x48] sm:$0xff] %vm1880, %v1607
      %1891 = vst.msk [vmem:[%s280 + $0x50] sm:$0xff] %vm1880, %v1612
      %1892 = vst.msk [vmem:[%s280 + $0x58] sm:$0xff] %vm1880, %v1617
      %1893 = vst.msk [vmem:[%s280 + $0x60] sm:$0xff] %vm1880, %v1622
      %1894 = vst.msk [vmem:[%s280 + $0x68] sm:$0xff] %vm1880, %v1627
      %1895 = vst.msk [vmem:[%s280 + $0x70] sm:$0xff] %vm1880, %v1632
      %1896 = vst.msk [vmem:[%s280 + $0x78] sm:$0xff] %vm1880, %v1637
      %1897 = vst.msk [vmem:[%s280 + $0x80] sm:$0xff] %vm1880, %v1642
      %1898 = vst.msk [vmem:[%s280 + $0x88] sm:$0xff] %vm1880, %v1647
      %1899 = vst.msk [vmem:[%s280 + $0x90] sm:$0xff] %vm1880, %v1652
      %1900 = vst.msk [vmem:[%s280 + $0x98] sm:$0xff] %vm1880, %v1657
      %1901 = vst.msk [vmem:[%s280 + $0xa0] sm:$0xff] %vm1880, %v1662
      %1902 = vst.msk [vmem:[%s280 + $0xa8] sm:$0xff] %vm1880, %v1667
      %1903 = vst.msk [vmem:[%s280 + $0xb0] sm:$0xff] %vm1880, %v1672
      %1904 = vst.msk [vmem:[%s280 + $0xb8] sm:$0xff] %vm1880, %v1677
      %1905 = vst.msk [vmem:[%s280 + $0xc0] sm:$0xff] %vm1880, %v1682
      %1906 = vst.msk [vmem:[%s280 + $0xc8] sm:$0xff] %vm1880, %v1687
      %1907 = vst.msk [vmem:[%s280 + $0xd0] sm:$0xff] %vm1880, %v1692
      %1908 = vst.msk [vmem:[%s280 + $0xd8] sm:$0xff] %vm1880, %v1697
      %1909 = vst.msk [vmem:[%s280 + $0xe0] sm:$0xff] %vm1880, %v1702
      %1910 = vst.msk [vmem:[%s280 + $0xe8] sm:$0xff] %vm1880, %v1707
      %1911 = vst.msk [vmem:[%s280 + $0xf0] sm:$0xff] %vm1880, %v1712
      %1912 = vst.msk [vmem:[%s280 + $0xf8] sm:$0xff] %vm1880, %v1717
      %1913 = vst.msk [vmem:[%s280 + $0x100] sm:$0xff] %vm1880, %v1722
      %1914 = vst.msk [vmem:[%s280 + $0x108] sm:$0xff] %vm1880, %v1727
      %1915 = vst.msk [vmem:[%s280 + $0x110] sm:$0xff] %vm1880, %v1732
      %1916 = vst.msk [vmem:[%s280 + $0x118] sm:$0xff] %vm1880, %v1737
      %1917 = vst.msk [vmem:[%s280 + $0x120] sm:$0xff] %vm1880, %v1742
      %1918 = vst.msk [vmem:[%s280 + $0x128] sm:$0xff] %vm1880, %v1747
      %1919 = vst.msk [vmem:[%s280 + $0x130] sm:$0xff] %vm1880, %v1752
      %1920 = vst.msk [vmem:[%s280 + $0x138] sm:$0xff] %vm1880, %v1757
      %1921 = vst.msk [vmem:[%s280 + $0x140] sm:$0xff] %vm1880, %v1762
      %1922 = vst.msk [vmem:[%s280 + $0x148] sm:$0xff] %vm1880, %v1767
      %1923 = vst.msk [vmem:[%s280 + $0x150] sm:$0xff] %vm1880, %v1772
      %1924 = vst.msk [vmem:[%s280 + $0x158] sm:$0xff] %vm1880, %v1777
      %1925 = vst.msk [vmem:[%s280 + $0x160] sm:$0xff] %vm1880, %v1782
      %1926 = vst.msk [vmem:[%s280 + $0x168] sm:$0xff] %vm1880, %v1787
      %1927 = vst.msk [vmem:[%s280 + $0x170] sm:$0xff] %vm1880, %v1792
      %1928 = vst.msk [vmem:[%s280 + $0x178] sm:$0xff] %vm1880, %v1797
      %1929 = vst.msk [vmem:[%s280 + $0x180] sm:$0xff] %vm1880, %v1802
      %1930 = vst.msk [vmem:[%s280 + $0x188] sm:$0xff] %vm1880, %v1807
      %1931 = vst.msk [vmem:[%s280 + $0x190] sm:$0xff] %vm1880, %v1812
      %1932 = vst.msk [vmem:[%s280 + $0x198] sm:$0xff] %vm1880, %v1817
      %1933 = vst.msk [vmem:[%s280 + $0x1a0] sm:$0xff] %vm1880, %v1822
      %1934 = vst.msk [vmem:[%s280 + $0x1a8] sm:$0xff] %vm1880, %v1827
      %1935 = vst.msk [vmem:[%s280 + $0x1b0] sm:$0xff] %vm1880, %v1832
      %1936 = vst.msk [vmem:[%s280 + $0x1b8] sm:$0xff] %vm1880, %v1837
      %1937 = vst.msk [vmem:[%s280 + $0x1c0] sm:$0xff] %vm1880, %v1842
      %1938 = vst.msk [vmem:[%s280 + $0x1c8] sm:$0xff] %vm1880, %v1847
      %1939 = vst.msk [vmem:[%s280 + $0x1d0] sm:$0xff] %vm1880, %v1852
      %1940 = vst.msk [vmem:[%s280 + $0x1d8] sm:$0xff] %vm1880, %v1857
      %1941 = vst.msk [vmem:[%s280 + $0x1e0] sm:$0xff] %vm1880, %v1862
      %1942 = vst.msk [vmem:[%s280 + $0x1e8] sm:$0xff] %vm1880, %v1867
      %1943 = vst.msk [vmem:[%s280 + $0x1f0] sm:$0xff] %vm1880, %v1872
      %1944 = vst.msk [vmem:[%s280 + $0x1f8] sm:$0xff] %vm1880, %v1877
      %s1945 = smul.u32 64, %s18
      %p1946 = scmp.lt.s32.totalorder %s1945, 127
      %s1947 = scalar_select %p1946, %s1945, 127
      %s1948 = smul.addr %s1947, 8
      %s1949 = scalar_lea.vmem %s7, %s1948
      // Predicated region
      $region49: #{dqn_linear_forward.1} parent=47 // pred_check
        %p1950 = pneg %p188
      $region50: #{dqn_linear_forward.1} parent=47 // pred_check_branch
        %1952 = sbr.rel (%p1950) target = $region52
      $region51: #{dqn_linear_forward.1} parent=47 // pred_region
        %s1953 = smul.u32 64, %s18
      $region52: #{dqn_linear_forward.1} parent=47 // pred_fallthru
        _
    $region48: #{dqn_linear_forward.1} parent=5 // pred_fallthru
      _
    %p1954 = scmp.le.s32.totalorder 2, %s13
    // Predicated region
    $region53: #{dqn_linear_forward.1} parent=5 // pred_check
      %p1955 = pneg %p1954
    $region54: #{dqn_linear_forward.1} parent=5 // pred_check_branch
      %1957 = sbr.rel (%p1955) target = $region56
    $region55: #{dqn_linear_forward.1} parent=5 // pred_region
      %s1958 = ssub.s32 %s13, 2
      // Predicated region
      $region57: #{dqn_linear_forward.1} parent=55 // pred_check
        %p1959 = pneg %p194
      $region58: #{dqn_linear_forward.1} parent=55 // pred_check_branch
        %1961 = sbr.rel (%p1959) target = $region60
      $region59: #{dqn_linear_forward.1} parent=55 // pred_region
        %s1962 = smul.u32 64, %s19
        %p1963 = scmp.lt.s32.totalorder %s1962, 127
        %s1964 = scalar_select %p1963, %s1962, 127
        %s1965 = smul.addr %s1964, 8
        %s1966 = scalar_lea.vmem %s7, %s1965
      $region60: #{dqn_linear_forward.1} parent=55 // pred_fallthru
        _
    $region56: #{dqn_linear_forward.1} parent=5 // pred_fallthru
      _
  $region6: #{dqn_linear_forward.1} parent=0 // loop_footer
    %s17 = sadd.s32 1, %s13
  $region7: #{dqn_linear_forward.1} parent=0 // loop_footer_branch
    %12 = sbr.rel target = $region3
  $region8: #{dqn_linear_forward.1} parent=0 // loop_exit
    _

</llo_original>
